<compile_context>
chip_gen: v7x
topology: tpu7x:2x2x1
jax: 0.10.0
libtpu: 0.0.40
codegen_flags: <defaults>
</compile_context>

<pallas_src>
import functools

import jax
import jax.numpy as jnp
from jax import lax
from jax.experimental import pallas as pl
from jax.experimental.pallas import tpu as pltpu


def _deconv_kernel(x_ref, w_ref, *args, bt, h, w, oc, final_layer):
    """ConvTranspose2d(k=4, s=2) for one tile of `bt` batches.

    x_ref : (bt*H*W, IC)   bf16, channels-last rows.
    w_ref : (IC, 16*OC)    bf16, col = ((ph*2 + qh)*4 + kw)*OC + c, kh = ph + 2*qh.
    final layer: b_ref (1, 2*OC) f32 bias (tiled over the column phase),
                 y_ref (bt, OH, WP, 2*OC) f32  (bitcast of NHWC (bt, OH, OW, OC)).
    non-final:   y_ref as above (no bias -- it cancels in BatchNorm),
                 stats_ref (1, 2, 2*OC) f32: [sum, sum-of-squares], still split by
                 column phase; folded per-channel in the wrapper.
    """
    if final_layer:
        b_ref, y_ref = args
        stats_ref = None
    else:
        y_ref, stats_ref = args

    hp, wp = h + 1, w + 1

    # Single fused MXU contraction (f32 accumulation), one row per input pixel.
    taps = jnp.dot(x_ref[...], w_ref[...], preferred_element_type=jnp.float32)
    taps = taps.reshape(bt, h, w, 16 * oc)          # leading-dim split: layout-neutral

    zcol = jnp.zeros((bt, h, 1, 2 * oc), jnp.float32)
    zrow = jnp.zeros((bt, 1, wp, 2 * oc), jnp.float32)

    # Overlap-add in registers.  For a fixed (row-phase ph, row-shift qh) the
    # matmul chunk is already column-phase interleaved (.., iw, pw*OC + c):
    #   [base, base+2*OC)        kw in {0,1}  (column shift qw = 0)
    #   [base+2*OC, base+4*OC)   kw in {2,3}  (column shift qw = 1)
    rows = []
    for ph in range(2):
        shifted = []
        for qh in range(2):
            base = (ph * 2 + qh) * 4 * oc
            lo = taps[..., base:base + 2 * oc]
            hi = taps[..., base + 2 * oc:base + 4 * oc]
            shifted.append(jnp.concatenate([lo, zcol], axis=2)
                           + jnp.concatenate([zcol, hi], axis=2))    # (bt, H, WP, 2*OC)
        rows.append(jnp.concatenate([shifted[0], zrow], axis=1)
                    + jnp.concatenate([zrow, shifted[1]], axis=1))   # (bt, HP, WP, 2*OC)

    if not final_layer:
        # Per-(column-phase, channel) batch statistics for BatchNorm.
        s = (jnp.sum(rows[0], axis=(0, 1, 2), keepdims=True)
             + jnp.sum(rows[1], axis=(0, 1, 2), keepdims=True)).reshape(1, 2 * oc)
        sq = (jnp.sum(rows[0] * rows[0], axis=(0, 1, 2), keepdims=True)
              + jnp.sum(rows[1] * rows[1], axis=(0, 1, 2), keepdims=True)).reshape(1, 2 * oc)
        stats_ref[0, 0:1, :] = s
        stats_ref[0, 1:2, :] = sq

    # Interleave the two row phases into the final layout.  Merging the (HP, 2)
    # leading dims is layout-neutral (last two dims untouched).
    y = jnp.stack([rows[0], rows[1]], axis=2).reshape(bt, 2 * hp, wp, 2 * oc)

    if final_layer:
        y_ref[...] = jnp.tanh(y + b_ref[...])
    else:
        y_ref[...] = y


def _bn_relu_kernel(y_ref, scale_ref, shift_ref, o_ref):
    """out = relu(y * scale + shift) over lane-dense (.., OH, OW*OC) rows."""
    o_ref[...] = jnp.maximum(y_ref[...] * scale_ref[...] + shift_ref[...], 0.0)


def _pick_batch_tile(n, h, w, ic, oc):
    """Batches per grid step: tall enough M to amortize ~0.35us step overhead and
    feed the MXU, small enough for double-buffered blocks to stay well inside a
    32 MiB scoped-VMEM budget (v7x-safe), keeping >= 2 parallel steps where
    possible so both v7x TensorCores get work."""
    hw = h * w
    oh, ow = 2 * h + 2, 2 * w + 2
    bytes_per_batch = 2 * (hw * ic * 2 + oh * ow * oc * 4)     # dbl-buffered in + out
    mem_cap = max(1, (8 << 20) // max(bytes_per_batch, 1))
    target = min(max(1, 256 // hw), mem_cap)
    best = 1
    for d in range(1, n + 1):
        if n % d or d > target:
            continue
        if (d * hw) % 8 and d != n:        # sublane alignment of the x block
            continue
        if n // d >= 2 or n < 2:
            best = d
    if (best * hw) % 8 and best != n:
        best = n                           # full-array block is always legal
    return best


def gen_block(x_nchw, weight, bias, gamma, beta, *, final_layer=False, eps=1e-5):
    """Pallas GenBlock forward.  x_nchw: (N, IC, H, W); weight: (IC, OC, K, K)."""
    n, ic, h, w = x_nchw.shape
    ic2, oc, k, k2 = weight.shape
    assert ic2 == ic and k == 4 and k2 == 4          # module defaults: k=4, stride=2
    hp, wp = h + 1, w + 1
    oh, ow = 2 * hp, 2 * wp                          # = (H-1)*2 + 4
    wl = wp * 2 * oc                                 # lane width of one output row

    bt = _pick_batch_tile(n, h, w, ic, oc)
    steps = n // bt

    # Channels-last bf16 operands for the MXU (f32 accumulation in-kernel).
    # TODO(synk): in a stacked generator, keep activations NHWC between blocks so
    # this input transpose (and the final NCHW transpose) drop out of HBM traffic.
    x_flat = jnp.transpose(x_nchw, (0, 2, 3, 1)).reshape(n * h * w, ic)
    x_flat = x_flat.astype(jnp.bfloat16)

    # Weight columns ordered (row-phase ph, row-shift qh, kw, oc) with kh = ph + 2*qh,
    # so the matmul output is already column-phase interleaved per input pixel.
    wt = jnp.transpose(weight, (0, 2, 3, 1)).reshape(ic, 2, 2, k, oc)  # (ic,qh,ph,kw,oc)
    w_fused = jnp.transpose(wt, (0, 2, 1, 3, 4)).reshape(ic, k * k * oc)
    w_fused = w_fused.astype(jnp.bfloat16)

    kern = functools.partial(_deconv_kernel, bt=bt, h=h, w=w, oc=oc,
                             final_layer=final_layer)

    y_shape = jax.ShapeDtypeStruct((n, oh, wp, 2 * oc), jnp.float32)
    y_spec = pl.BlockSpec((bt, oh, wp, 2 * oc), lambda i: (i, 0, 0, 0))
    x_spec = pl.BlockSpec((bt * h * w, ic), lambda i: (i, 0))
    w_spec = pl.BlockSpec((ic, k * k * oc), lambda i: (0, 0))
    cparams = pltpu.CompilerParams(
        dimension_semantics=("parallel",),
        vmem_limit_bytes=32 * 1024 * 1024)

    if final_layer:
        b_t = jnp.tile(bias.astype(jnp.float32), 2).reshape(1, 2 * oc)
        y = pl.pallas_call(
            kern,
            grid=(steps,),
            in_specs=[x_spec, w_spec, pl.BlockSpec((1, 2 * oc), lambda i: (0, 0))],
            out_specs=y_spec,
            out_shape=y_shape,
            compiler_params=cparams,
        )(x_flat, w_fused, b_t)
    else:
        y_pre, stats = pl.pallas_call(
            kern,
            grid=(steps,),
            in_specs=[x_spec, w_spec],
            out_specs=(y_spec, pl.BlockSpec((1, 2, 2 * oc), lambda i: (i, 0, 0))),
            out_shape=(y_shape,
                       jax.ShapeDtypeStruct((steps, 2, 2 * oc), jnp.float32)),
            compiler_params=cparams,
        )(x_flat, w_fused)

        # BatchNorm2d training-mode batch stats (biased variance), folded into a
        # per-channel scale/shift.  The conv bias was dropped in the kernel: a
        # pre-BN per-channel bias cancels exactly in the normalization.
        count = float(n * oh * ow)
        tot = jnp.sum(stats, axis=0).reshape(2, 2, oc).sum(axis=1)   # (2, OC)
        mean = tot[0] / count
        var = jnp.maximum(tot[1] / count - mean * mean, 0.0)
        scale = gamma.astype(jnp.float32) * lax.rsqrt(var + eps)
        shift = beta.astype(jnp.float32) - mean * scale
        scale_t = jnp.tile(scale, 2 * wp).reshape(1, wl)   # tiled to one output row
        shift_t = jnp.tile(shift, 2 * wp).reshape(1, wl)

        # Lane-dense in-place BN + ReLU over (N, OH, OW*OC) rows.
        row_spec = pl.BlockSpec((bt, oh, wl), lambda i: (i, 0, 0))
        y = pl.pallas_call(
            _bn_relu_kernel,
            grid=(steps,),
            in_specs=[row_spec,
                      pl.BlockSpec((1, wl), lambda i: (0, 0)),
                      pl.BlockSpec((1, wl), lambda i: (0, 0))],
            out_specs=row_spec,
            out_shape=jax.ShapeDtypeStruct((n, oh, wl), jnp.float32),
            input_output_aliases={0: 0},
            compiler_params=cparams,
        )(y_pre.reshape(n, oh, wl), scale_t, shift_t)

    # (N, OH, OW, OC) is a free bitcast of the kernel layout; final transpose to
    # NCHW to match the PyTorch module's output format.
    return jnp.transpose(jnp.reshape(y, (n, oh, ow, oc)), (0, 3, 1, 2))


def gen_block_ref(x, weight, bias, gamma, beta, *, final_layer=False, eps=1e-5):
    """Pure-JAX reference with PyTorch ConvTranspose2d / BatchNorm2d semantics."""
    n, ic, h, w = x.shape
    _, oc, k, _ = weight.shape
    stride = 2
    oh, ow = (h - 1) * stride + k, (w - 1) * stride + k
    y = jnp.zeros((n, oc, oh, ow), jnp.float32)
    for kh in range(k):
        for kw in range(k):
            contrib = jnp.einsum("nihw,io->nohw", x, weight[:, :, kh, kw])
            y = y.at[:, :, kh:kh + stride * h:stride,
                     kw:kw + stride * w:stride].add(contrib)
    y = y + bias[None, :, None, None]
    if final_layer:
        return jnp.tanh(y)
    mean = y.mean(axis=(0, 2, 3), keepdims=True)
    var = ((y - mean) ** 2).mean(axis=(0, 2, 3), keepdims=True)
    yn = (gamma[None, :, None, None] * (y - mean) / jnp.sqrt(var + eps)
          + beta[None, :, None, None])
    return jnp.maximum(yn, 0.0)


if __name__ == "__main__":
    N, IC, OC, H, W, K = 2, 16, 8, 8, 8, 4
    key = jax.random.PRNGKey(0)
    k1, k2, k3, k4, k5 = jax.random.split(key, 5)
    x = jax.random.normal(k1, (N, IC, H, W), jnp.float32)
    weight = 0.02 * jax.random.normal(k2, (IC, OC, K, K), jnp.float32)
    bias = 0.02 * jax.random.normal(k3, (OC,), jnp.float32)
    gamma = 1.0 + 0.1 * jax.random.normal(k4, (OC,), jnp.float32)
    beta = 0.1 * jax.random.normal(k5, (OC,), jnp.float32)

    gb = jax.jit(gen_block, static_argnames=("final_layer",))

    # The kernel feeds the MXU bf16 operands (f32 accumulation); compare against
    # the f32 reference evaluated on bf16-rounded operands so the check is tight.
    xq = x.astype(jnp.bfloat16).astype(jnp.float32)
    wq = weight.astype(jnp.bfloat16).astype(jnp.float32)

    # non-final layer: ConvTranspose2d -> BatchNorm2d -> ReLU
    out = jax.block_until_ready(gb(x, weight, bias, gamma, beta, final_layer=False))
    ref = gen_block_ref(xq, wq, bias, gamma, beta, final_layer=False)
    assert out.shape == (N, OC, 2 * H + 2, 2 * W + 2)
    assert jnp.allclose(out, ref, atol=2e-3, rtol=2e-3), \
        float(jnp.max(jnp.abs(out - ref)))

    # final layer: ConvTranspose2d -> Tanh
    out_f = jax.block_until_ready(gb(x, weight, bias, gamma, beta, final_layer=True))
    ref_f = gen_block_ref(xq, wq, bias, gamma, beta, final_layer=True)
    assert jnp.allclose(out_f, ref_f, atol=2e-3, rtol=2e-3), \
        float(jnp.max(jnp.abs(out_f - ref_f)))

    print("KERNEL_OK")
</pallas_src>

<mosaic_0001>
module attributes {stable_mosaic.version = 11 : i64} {
  func.func @_deconv_kernel(%arg0: i32, %arg1: memref<64x16xbf16, #tpu.memory_space<vmem>>, %arg2: memref<16x128xbf16, #tpu.memory_space<vmem>>, %arg3: memref<1x18x9x16xf32, #tpu.memory_space<vmem>>, %arg4: memref<1x2x16xf32, #tpu.memory_space<vmem>>) attributes {dimension_semantics = [#tpu.dimension_semantics<parallel>], iteration_bounds = array<i64: 2>, scalar_prefetch = 0 : i64, scratch_operands = 0 : i64, tpu.core_type = #tpu.core_type<tc>, window_params = [{transform_indices = @transform_0, window_bounds = array<i64: 64, 16>}, {pipeline_mode = #tpu.pipeline_mode<synchronous>, transform_indices = @transform_1, window_bounds = array<i64: 16, 128>}, {transform_indices = @transform_2, window_bounds = array<i64: 1, 18, 9, 16>}, {transform_indices = @transform_3, window_bounds = array<i64: 1, 2, 16>}]} {
    %c0 = arith.constant 0 : index
    %c0_0 = arith.constant 0 : index
    %0 = vector.load %arg1[%c0, %c0_0] : memref<64x16xbf16, #tpu.memory_space<vmem>>, vector<64x16xbf16>
    %c0_1 = arith.constant 0 : index
    %c0_2 = arith.constant 0 : index
    %1 = vector.load %arg2[%c0_1, %c0_2] : memref<16x128xbf16, #tpu.memory_space<vmem>>, vector<16x128xbf16>
    %cst = arith.constant dense<0.000000e+00> : vector<64x128xf32>
    %2 = tpu.matmul %0, %1, %cst {dimension_numbers = #tpu.dot_dimension_numbers<[1], [0], [0], [1], [0, 0, 1, 1], [], []>} : vector<64x16xbf16>, vector<16x128xbf16>, vector<64x128xf32> -> vector<64x128xf32>
    %3 = vector.shape_cast %2 : vector<64x128xf32> to vector<1x8x8x128xf32>
    %cst_3 = arith.constant 0.000000e+00 : f32
    %4 = vector.broadcast %cst_3 : f32 to vector<1x8x1x16xf32>
    %cst_4 = arith.constant 0.000000e+00 : f32
    %5 = vector.broadcast %cst_4 : f32 to vector<1x1x9x16xf32>
    %6 = vector.extract_strided_slice %3 {offsets = [0, 0, 0, 0], sizes = [1, 8, 8, 16], strides = [1, 1, 1, 1]} : vector<1x8x8x128xf32> to vector<1x8x8x16xf32>
    %7 = vector.extract_strided_slice %3 {offsets = [0, 0, 0, 16], sizes = [1, 8, 8, 16], strides = [1, 1, 1, 1]} : vector<1x8x8x128xf32> to vector<1x8x8x16xf32>
    %8 = tpu.concatenate %6, %4 in 2 : vector<1x8x8x16xf32>, vector<1x8x1x16xf32> -> vector<1x8x9x16xf32>
    %9 = tpu.concatenate %4, %7 in 2 : vector<1x8x1x16xf32>, vector<1x8x8x16xf32> -> vector<1x8x9x16xf32>
    %10 = arith.addf %8, %9 : vector<1x8x9x16xf32>
    %11 = vector.extract_strided_slice %3 {offsets = [0, 0, 0, 32], sizes = [1, 8, 8, 16], strides = [1, 1, 1, 1]} : vector<1x8x8x128xf32> to vector<1x8x8x16xf32>
    %12 = vector.extract_strided_slice %3 {offsets = [0, 0, 0, 48], sizes = [1, 8, 8, 16], strides = [1, 1, 1, 1]} : vector<1x8x8x128xf32> to vector<1x8x8x16xf32>
    %13 = tpu.concatenate %11, %4 in 2 : vector<1x8x8x16xf32>, vector<1x8x1x16xf32> -> vector<1x8x9x16xf32>
    %14 = tpu.concatenate %4, %12 in 2 : vector<1x8x1x16xf32>, vector<1x8x8x16xf32> -> vector<1x8x9x16xf32>
    %15 = arith.addf %13, %14 : vector<1x8x9x16xf32>
    %16 = tpu.concatenate %10, %5 in 1 : vector<1x8x9x16xf32>, vector<1x1x9x16xf32> -> vector<1x9x9x16xf32>
    %17 = tpu.concatenate %5, %15 in 1 : vector<1x1x9x16xf32>, vector<1x8x9x16xf32> -> vector<1x9x9x16xf32>
    %18 = arith.addf %16, %17 : vector<1x9x9x16xf32>
    %19 = vector.extract_strided_slice %3 {offsets = [0, 0, 0, 64], sizes = [1, 8, 8, 16], strides = [1, 1, 1, 1]} : vector<1x8x8x128xf32> to vector<1x8x8x16xf32>
    %20 = vector.extract_strided_slice %3 {offsets = [0, 0, 0, 80], sizes = [1, 8, 8, 16], strides = [1, 1, 1, 1]} : vector<1x8x8x128xf32> to vector<1x8x8x16xf32>
    %21 = tpu.concatenate %19, %4 in 2 : vector<1x8x8x16xf32>, vector<1x8x1x16xf32> -> vector<1x8x9x16xf32>
    %22 = tpu.concatenate %4, %20 in 2 : vector<1x8x1x16xf32>, vector<1x8x8x16xf32> -> vector<1x8x9x16xf32>
    %23 = arith.addf %21, %22 : vector<1x8x9x16xf32>
    %24 = vector.extract_strided_slice %3 {offsets = [0, 0, 0, 96], sizes = [1, 8, 8, 16], strides = [1, 1, 1, 1]} : vector<1x8x8x128xf32> to vector<1x8x8x16xf32>
    %25 = vector.extract_strided_slice %3 {offsets = [0, 0, 0, 112], sizes = [1, 8, 8, 16], strides = [1, 1, 1, 1]} : vector<1x8x8x128xf32> to vector<1x8x8x16xf32>
    %26 = tpu.concatenate %24, %4 in 2 : vector<1x8x8x16xf32>, vector<1x8x1x16xf32> -> vector<1x8x9x16xf32>
    %27 = tpu.concatenate %4, %25 in 2 : vector<1x8x1x16xf32>, vector<1x8x8x16xf32> -> vector<1x8x9x16xf32>
    %28 = arith.addf %26, %27 : vector<1x8x9x16xf32>
    %29 = tpu.concatenate %23, %5 in 1 : vector<1x8x9x16xf32>, vector<1x1x9x16xf32> -> vector<1x9x9x16xf32>
    %30 = tpu.concatenate %5, %28 in 1 : vector<1x1x9x16xf32>, vector<1x8x9x16xf32> -> vector<1x9x9x16xf32>
    %31 = arith.addf %29, %30 : vector<1x9x9x16xf32>
    %cst_5 = arith.constant dense<0.000000e+00> : vector<16xf32>
    %32 = vector.multi_reduction <add>, %18, %cst_5 [0, 1, 2] : vector<1x9x9x16xf32> to vector<16xf32>
    %33 = vector.shape_cast %32 : vector<16xf32> to vector<1x1x1x16xf32>
    %cst_6 = arith.constant dense<0.000000e+00> : vector<16xf32>
    %34 = vector.multi_reduction <add>, %31, %cst_6 [0, 1, 2] : vector<1x9x9x16xf32> to vector<16xf32>
    %35 = vector.shape_cast %34 : vector<16xf32> to vector<1x1x1x16xf32>
    %36 = arith.addf %33, %35 : vector<1x1x1x16xf32>
    %37 = vector.shape_cast %36 : vector<1x1x1x16xf32> to vector<1x16xf32>
    %38 = arith.mulf %18, %18 : vector<1x9x9x16xf32>
    %cst_7 = arith.constant dense<0.000000e+00> : vector<16xf32>
    %39 = vector.multi_reduction <add>, %38, %cst_7 [0, 1, 2] : vector<1x9x9x16xf32> to vector<16xf32>
    %40 = vector.shape_cast %39 : vector<16xf32> to vector<1x1x1x16xf32>
    %41 = arith.mulf %31, %31 : vector<1x9x9x16xf32>
    %cst_8 = arith.constant dense<0.000000e+00> : vector<16xf32>
    %42 = vector.multi_reduction <add>, %41, %cst_8 [0, 1, 2] : vector<1x9x9x16xf32> to vector<16xf32>
    %43 = vector.shape_cast %42 : vector<16xf32> to vector<1x1x1x16xf32>
    %44 = arith.addf %40, %43 : vector<1x1x1x16xf32>
    %45 = vector.shape_cast %44 : vector<1x1x1x16xf32> to vector<1x16xf32>
    %c0_9 = arith.constant 0 : index
    %c0_10 = arith.constant 0 : index
    %c0_11 = arith.constant 0 : index
    %46 = vector.load %arg4[%c0_9, %c0_10, %c0_11] : memref<1x2x16xf32, #tpu.memory_space<vmem>>, vector<1x1x16xf32>
    %47 = vector.shape_cast %46 : vector<1x1x16xf32> to vector<1x16xf32>
    %48 = vector.shape_cast %37 : vector<1x16xf32> to vector<1x1x16xf32>
    tpu.vector_store %arg4[%c0_9, %c0_10, %c0_11], %48 {strides = array<i32>} : memref<1x2x16xf32, #tpu.memory_space<vmem>>, vector<1x1x16xf32>,
    %c0_12 = arith.constant 0 : index
    %c1 = arith.constant 1 : index
    %c0_13 = arith.constant 0 : index
    %49 = vector.load %arg4[%c0_12, %c1, %c0_13] : memref<1x2x16xf32, #tpu.memory_space<vmem>>, vector<1x1x16xf32>
    %50 = vector.shape_cast %49 : vector<1x1x16xf32> to vector<1x16xf32>
    %51 = vector.shape_cast %45 : vector<1x16xf32> to vector<1x1x16xf32>
    tpu.vector_store %arg4[%c0_12, %c1, %c0_13], %51 {strides = array<i32>} : memref<1x2x16xf32, #tpu.memory_space<vmem>>, vector<1x1x16xf32>,
    %52 = vector.shape_cast %18 : vector<1x9x9x16xf32> to vector<1x9x1x9x16xf32>
    %53 = vector.shape_cast %31 : vector<1x9x9x16xf32> to vector<1x9x1x9x16xf32>
    %54 = tpu.concatenate %52, %53 in 2 : vector<1x9x1x9x16xf32>, vector<1x9x1x9x16xf32> -> vector<1x9x2x9x16xf32>
    %55 = vector.shape_cast %54 : vector<1x9x2x9x16xf32> to vector<1x18x9x16xf32>
    %c0_14 = arith.constant 0 : index
    %c0_15 = arith.constant 0 : index
    %c0_16 = arith.constant 0 : index
    %c0_17 = arith.constant 0 : index
    %56 = vector.load %arg3[%c0_14, %c0_15, %c0_16, %c0_17] : memref<1x18x9x16xf32, #tpu.memory_space<vmem>>, vector<1x18x9x16xf32>
    tpu.vector_store %arg3[%c0_14, %c0_15, %c0_16, %c0_17], %55 {strides = array<i32>} : memref<1x18x9x16xf32, #tpu.memory_space<vmem>>, vector<1x18x9x16xf32>,
    return
  }
  func.func @transform_0(%arg0: i32) -> (i32, i32) {
    %c0_i32 = arith.constant 0 : i32
    %c0_i32_0 = arith.constant 0 : i32
    return %arg0, %c0_i32 : i32, i32
  }
  func.func @transform_1(%arg0: i32) -> (i32, i32) {
    %c0_i32 = arith.constant 0 : i32
    %c0_i32_0 = arith.constant 0 : i32
    %c0_i32_1 = arith.constant 0 : i32
    return %c0_i32, %c0_i32_0 : i32, i32
  }
  func.func @transform_2(%arg0: i32) -> (i32, i32, i32, i32) {
    %c0_i32 = arith.constant 0 : i32
    %c0_i32_0 = arith.constant 0 : i32
    %c0_i32_1 = arith.constant 0 : i32
    %c0_i32_2 = arith.constant 0 : i32
    return %arg0, %c0_i32, %c0_i32_0, %c0_i32_1 : i32, i32, i32, i32
  }
  func.func @transform_3(%arg0: i32) -> (i32, i32, i32) {
    %c0_i32 = arith.constant 0 : i32
    %c0_i32_0 = arith.constant 0 : i32
    %c0_i32_1 = arith.constant 0 : i32
    return %arg0, %c0_i32, %c0_i32_0 : i32, i32, i32
  }
}

module attributes {stable_mosaic.version = 11 : i64} {
  func.func @_bn_relu_kernel(%arg0: i32, %arg1: memref<1x18x144xf32, #tpu.memory_space<vmem>>, %arg2: memref<1x144xf32, #tpu.memory_space<vmem>>, %arg3: memref<1x144xf32, #tpu.memory_space<vmem>>, %arg4: memref<1x18x144xf32, #tpu.memory_space<vmem>>) attributes {dimension_semantics = [#tpu.dimension_semantics<parallel>], iteration_bounds = array<i64: 2>, scalar_prefetch = 0 : i64, scratch_operands = 0 : i64, tpu.core_type = #tpu.core_type<tc>, window_params = [{transform_indices = @transform_0, window_bounds = array<i64: 1, 18, 144>}, {pipeline_mode = #tpu.pipeline_mode<synchronous>, transform_indices = @transform_1, window_bounds = array<i64: 1, 144>}, {pipeline_mode = #tpu.pipeline_mode<synchronous>, transform_indices = @transform_2, window_bounds = array<i64: 1, 144>}, {transform_indices = @transform_3, window_bounds = array<i64: 1, 18, 144>}]} {
    %c0 = arith.constant 0 : index
    %c0_0 = arith.constant 0 : index
    %c0_1 = arith.constant 0 : index
    %0 = vector.load %arg1[%c0, %c0_0, %c0_1] : memref<1x18x144xf32, #tpu.memory_space<vmem>>, vector<1x18x144xf32>
    %c0_2 = arith.constant 0 : index
    %c0_3 = arith.constant 0 : index
    %1 = vector.load %arg2[%c0_2, %c0_3] : memref<1x144xf32, #tpu.memory_space<vmem>>, vector<1x144xf32>
    %2 = vector.shape_cast %1 : vector<1x144xf32> to vector<1x1x144xf32>
    %3 = vector.broadcast %2 : vector<1x1x144xf32> to vector<1x18x144xf32>
    %4 = arith.mulf %0, %3 : vector<1x18x144xf32>
    %c0_4 = arith.constant 0 : index
    %c0_5 = arith.constant 0 : index
    %5 = vector.load %arg3[%c0_4, %c0_5] : memref<1x144xf32, #tpu.memory_space<vmem>>, vector<1x144xf32>
    %6 = vector.shape_cast %5 : vector<1x144xf32> to vector<1x1x144xf32>
    %7 = vector.broadcast %6 : vector<1x1x144xf32> to vector<1x18x144xf32>
    %8 = arith.addf %4, %7 : vector<1x18x144xf32>
    %cst = arith.constant 0.000000e+00 : f32
    %9 = vector.broadcast %cst : f32 to vector<1x18x144xf32>
    %10 = arith.maximumf %8, %9 : vector<1x18x144xf32>
    %c0_6 = arith.constant 0 : index
    %c0_7 = arith.constant 0 : index
    %c0_8 = arith.constant 0 : index
    %11 = vector.load %arg4[%c0_6, %c0_7, %c0_8] : memref<1x18x144xf32, #tpu.memory_space<vmem>>, vector<1x18x144xf32>
    tpu.vector_store %arg4[%c0_6, %c0_7, %c0_8], %10 {strides = array<i32>} : memref<1x18x144xf32, #tpu.memory_space<vmem>>, vector<1x18x144xf32>,
    return
  }
  func.func @transform_0(%arg0: i32) -> (i32, i32, i32) {
    %c0_i32 = arith.constant 0 : i32
    %c0_i32_0 = arith.constant 0 : i32
    %c0_i32_1 = arith.constant 0 : i32
    return %arg0, %c0_i32, %c0_i32_0 : i32, i32, i32
  }
  func.func @transform_1(%arg0: i32) -> (i32, i32) {
    %c0_i32 = arith.constant 0 : i32
    %c0_i32_0 = arith.constant 0 : i32
    %c0_i32_1 = arith.constant 0 : i32
    return %c0_i32, %c0_i32_0 : i32, i32
  }
  func.func @transform_2(%arg0: i32) -> (i32, i32) {
    %c0_i32 = arith.constant 0 : i32
    %c0_i32_0 = arith.constant 0 : i32
    %c0_i32_1 = arith.constant 0 : i32
    return %c0_i32, %c0_i32_0 : i32, i32
  }
  func.func @transform_3(%arg0: i32) -> (i32, i32, i32) {
    %c0_i32 = arith.constant 0 : i32
    %c0_i32_0 = arith.constant 0 : i32
    %c0_i32_1 = arith.constant 0 : i32
    return %arg0, %c0_i32, %c0_i32_0 : i32, i32, i32
  }
}

</mosaic_0001>

<llo_original>
// kernel: tile.18
$region0: #{tile.18}
  #allocation0 [shape = 's32[1]{0}', space=sflag, size = 0x4, scoped, tag = 'scoped memory for tile.18']
  %s0 = inlined_call_operand.vmem [shape: f32[8], index: 0, kind: input, shape index: {}]
  %s1 = inlined_call_operand.vmem [shape: f32[18,8], index: 1, kind: output, shape index: {}]
  // Predicated region
  $region2: #{tile.18} parent=0 // pred_check
    _
  $region3: #{tile.18} parent=0 // pred_check_branch
    %3 = sbr.rel (0) target = $region5
  $region4: #{tile.18} parent=0 // pred_region
    _
  $region5: #{tile.18} parent=0 // pred_fallthru
    _
  %v4 = vld [vmem:[%s0] ss:$0 sm:$0xff]
  %5 = vst [vmem:[%s1] sm:$0xff] %v4
  %s6 = scalar_lea.vmem %s1, 8
  %7 = vst [vmem:[%s6] sm:$0xff] %v4
  %s8 = scalar_lea.vmem %s1, 16
  %9 = vst [vmem:[%s8] sm:$0xff] %v4

// kernel: tile.19
$region0: #{tile.19}
  %s0 = inlined_call_operand.vmem [shape: f32[18,8], index: 0, kind: input, shape index: {}]
  %s1 = inlined_call_operand.vmem [shape: f32[1,144], index: 1, kind: output, shape index: {}]
  $region1: #{tile.19} parent=0
    #allocation0 [shape = 'u8[8192]{0}', space=vmem, size = 0x2000, scoped, tag = 'scoped mem for output reshape']
    %s2 = smov 3
    %v3 = vld [vmem:[%s0] ss:$16 sm:%s2]
    %vm4 = vcmask 64512
    %5 = vst.msk [vmem:[#allocation0] ss:$8 sm:$0x3] %vm4, %v3
    %s6 = scalar_lea.vmem %s0, 15
    %v7 = vld [vmem:[%s6] sm:$0x1]
    %8 = vrot.lane.b32.xlu0 %v7, 120
    %v9 = vpop.permute.xlu0 %8
    %vm10 = vcmask 1048512
    %11 = vst.msk [vmem:[#allocation0] sm:$0x1] %vm10, %v9
    %s12 = scalar_lea.vmem %s0, 14
    %v13 = vld [vmem:[%s12] sm:$0x1]
    %14 = vrot.lane.b32.xlu0 %v13, 112
    %v15 = vpop.permute.xlu0 %14
    %vm16 = vcmask 982912
    %17 = vst.msk [vmem:[#allocation0] sm:$0x1] %vm16, %v15
    %s18 = scalar_lea.vmem %s0, 13
    %v19 = vld [vmem:[%s18] sm:$0x1]
    %20 = vrot.lane.b32.xlu0 %v19, 104
    %v21 = vpop.permute.xlu0 %20
    %vm22 = vcmask 917312
    %23 = vst.msk [vmem:[#allocation0] sm:$0x1] %vm22, %v21
    %s24 = scalar_lea.vmem %s0, 12
    %v25 = vld [vmem:[%s24] sm:$0x1]
    %26 = vrot.lane.b32.xlu0 %v25, 96
    %v27 = vpop.permute.xlu0 %26
    %vm28 = vcmask 851712
    %29 = vst.msk [vmem:[#allocation0] sm:$0x1] %vm28, %v27
    %s30 = scalar_lea.vmem %s0, 11
    %v31 = vld [vmem:[%s30] sm:$0x1]
    %32 = vrot.lane.b32.xlu0 %v31, 88
    %v33 = vpop.permute.xlu0 %32
    %vm34 = vcmask 786112
    %35 = vst.msk [vmem:[#allocation0] sm:$0x1] %vm34, %v33
    %s36 = scalar_lea.vmem %s0, 10
    %v37 = vld [vmem:[%s36] sm:$0x1]
    %38 = vrot.lane.b32.xlu0 %v37, 80
    %v39 = vpop.permute.xlu0 %38
    %vm40 = vcmask 720512
    %41 = vst.msk [vmem:[#allocation0] sm:$0x1] %vm40, %v39
    %s42 = scalar_lea.vmem %s0, 9
    %v43 = vld [vmem:[%s42] sm:$0x1]
    %44 = vrot.lane.b32.xlu0 %v43, 72
    %v45 = vpop.permute.xlu0 %44
    %vm46 = vcmask 654912
    %47 = vst.msk [vmem:[#allocation0] sm:$0x1] %vm46, %v45
    %s48 = scalar_lea.vmem %s0, 8
    %v49 = vld [vmem:[%s48] sm:$0x1]
    %50 = vrot.lane.b32.xlu0 %v49, 64
    %v51 = vpop.permute.xlu0 %50
    %vm52 = vcmask 589312
    %53 = vst.msk [vmem:[#allocation0] sm:$0x1] %vm52, %v51
    %s54 = scalar_lea.vmem %s0, 7
    %v55 = vld [vmem:[%s54] sm:$0x1]
    %56 = vrot.lane.b32.xlu0 %v55, 56
    %v57 = vpop.permute.xlu0 %56
    %vm58 = vcmask 523712
    %59 = vst.msk [vmem:[#allocation0] sm:$0x1] %vm58, %v57
    %s60 = scalar_lea.vmem %s0, 6
    %v61 = vld [vmem:[%s60] sm:$0x1]
    %62 = vrot.lane.b32.xlu0 %v61, 48
    %v63 = vpop.permute.xlu0 %62
    %vm64 = vcmask 458112
    %65 = vst.msk [vmem:[#allocation0] sm:$0x1] %vm64, %v63
    %s66 = scalar_lea.vmem %s0, 5
    %v67 = vld [vmem:[%s66] sm:$0x1]
    %68 = vrot.lane.b32.xlu0 %v67, 40
    %v69 = vpop.permute.xlu0 %68
    %vm70 = vcmask 392512
    %71 = vst.msk [vmem:[#allocation0] sm:$0x1] %vm70, %v69
    %s72 = scalar_lea.vmem %s0, 4
    %v73 = vld [vmem:[%s72] sm:$0x1]
    %74 = vrot.lane.b32.xlu0 %v73, 32
    %v75 = vpop.permute.xlu0 %74
    %vm76 = vcmask 326912
    %77 = vst.msk [vmem:[#allocation0] sm:$0x1] %vm76, %v75
    %s78 = scalar_lea.vmem %s0, 3
    %v79 = vld [vmem:[%s78] sm:$0x1]
    %80 = vrot.lane.b32.xlu0 %v79, 24
    %v81 = vpop.permute.xlu0 %80
    %vm82 = vcmask 261312
    %83 = vst.msk [vmem:[#allocation0] sm:$0x1] %vm82, %v81
    %s84 = scalar_lea.vmem %s0, 2
    %v85 = vld [vmem:[%s84] sm:$0x1]
    %86 = vrot.lane.b32.xlu0 %v85, 16
    %v87 = vpop.permute.xlu0 %86
    %vm88 = vcmask 195712
    %89 = vst.msk [vmem:[#allocation0] sm:$0x1] %vm88, %v87
    %s90 = scalar_lea.vmem %s0, 1
    %s91 = smov 3
    %v92 = vld [vmem:[%s90] ss:$16 sm:%s91]
    %93 = vrot.lane.b32.xlu0 %v92, 8
    %v94 = vpop.permute.xlu0 %93
    %vm95 = vcmask 130112
    %96 = vst.msk [vmem:[#allocation0] ss:$8 sm:$0x3] %vm95, %v94
    %s98 = sshllo.u32 0, 1
    %v100 = vld [vmem:[#allocation0] sm:%s98]
    %s101 = sshllo.u32 0, 1
    %102 = vst [vmem:[%s1] sm:%s101] %v100
    %s103 = scalar_lea.vmem [#allocation0], 8
    %v104 = vld [vmem:[%s103] sm:%s98]
    %s105 = sshllo.u32 0, 1
    %s106 = scalar_lea.vmem %s1, 1
    %107 = vst [vmem:[%s106] sm:%s105] %v104

// kernel: gen_block.3
$region0: #{gen_block.3}
  #allocation0 [shape = 'u32[]', space=smem, size = 0x4, offset = 0x4, fixed_abs, tag = 'smem constant byte address 0x4 - core index']
  #allocation1 [shape = 'u32[144,128]{1,0:T(1,128)}', space=vmem, size = 0x12000, scoped, tag = 'internal scratch']
  %s0 = inlined_call_operand.vmem [shape: f32[2,18,144], index: 0, kind: input, shape index: {}, may-alias: {0,3}]
  %s1 = inlined_call_operand.vmem [shape: f32[1,144], index: 1, kind: input, shape index: {}]
  %s2 = inlined_call_operand.vmem [shape: f32[1,144], index: 2, kind: input, shape index: {}]
  %s3 = inlined_call_operand.vmem [shape: f32[2,18,144], index: 3, kind: output, shape index: {}, may-alias: {0,3}]
  %s4 = sld [smem:[#allocation0]]
  $region45: #{gen_block.3} parent=0
    _
  %s6 = ssub.s32 1, %s4
  %s7 = scalar_select 0, %s6, %s4
  loop: start=0, step=1, limit=4
  $region2: #{gen_block.3} parent=0 // loop_pre_header
    _
  $region3: #{gen_block.3} parent=0 // loop_header
    %s9 = sphi 0, %s13
    %p10 = scmp.ge.s32.totalorder %s9, 4
    %s19 = sphi 0, %s21
    %s22 = sphi 0, %s19
    %s23 = sphi 0, %s22
    %s39 = sphi 0, %s23
    %s43 = sphi 0, %s43
    %s45 = sphi 0, %s43
    %s46 = sphi 0, %s45
    %s60 = sphi 0, %s46
    %s64 = sphi 0, %s64
    %s66 = sphi 0, %s64
    %s67 = sphi 0, %s66
    %s81 = sphi 0, %s67
    %s87 = sphi 0, %s89
    %s90 = sphi 0, %s87
    %s91 = sphi 0, %s90
    %s107 = sphi 0, %s91
  $region4: #{gen_block.3} parent=0 // loop_header_branch
    %12 = sbr.rel (%p10) target = $region8
  $region5: #{gen_block.3} parent=0 // loop_body
    %s14 = ssub.s32 %s9, 1
    %s15 = ssub.s32 %s9, 2
    %s16 = sadd.s32 %s9, 1
    %s17 = ssub.s32 %s9, %s16
    %p18 = scmp.eq.s32.totalorder %s17, 0
    %s20 = sadd.s32 %s19, 1
    %s21 = scalar_select %p18, %s19, %s20
    %p24 = pneg %p18
    %p25 = scmp.eq.s32.totalorder %s9, 1
    %p26 = por %p24, %p25
    %p27 = scmp.ne.s32.totalorder %s19, %s22
    %p28 = scmp.eq.s32.totalorder %s9, 0
    %p29 = por %p27, %p28
    %p30 = scmp.ne.s32.totalorder %s19, %s22
    %p31 = scmp.eq.s32.totalorder %s14, 1
    %p32 = por %p30, %p31
    %p33 = scmp.ne.s32.totalorder %s22, %s23
    %p34 = scmp.eq.s32.totalorder %s14, 0
    %p35 = por %p33, %p34
    %p36 = scmp.ne.s32.totalorder %s22, %s23
    %p37 = scmp.eq.s32.totalorder %s15, 1
    %p38 = por %p36, %p37
    %p40 = scmp.ne.s32.totalorder %s23, %s39
    %p41 = scmp.eq.s32.totalorder %s15, 0
    %p42 = por %p40, %p41
    %s44 = sadd.s32 %s43, 1
    %p47 = scmp.eq.s32.totalorder %s9, 1
    %p48 = scmp.ne.s32.totalorder %s43, %s45
    %p49 = scmp.eq.s32.totalorder %s9, 0
    %p50 = por %p48, %p49
    %p51 = scmp.ne.s32.totalorder %s43, %s45
    %p52 = scmp.eq.s32.totalorder %s14, 1
    %p53 = por %p51, %p52
    %p54 = scmp.ne.s32.totalorder %s45, %s46
    %p55 = scmp.eq.s32.totalorder %s14, 0
    %p56 = por %p54, %p55
    %p57 = scmp.ne.s32.totalorder %s45, %s46
    %p58 = scmp.eq.s32.totalorder %s15, 1
    %p59 = por %p57, %p58
    %p61 = scmp.ne.s32.totalorder %s46, %s60
    %p62 = scmp.eq.s32.totalorder %s15, 0
    %p63 = por %p61, %p62
    %s65 = sadd.s32 %s64, 1
    %p68 = scmp.eq.s32.totalorder %s9, 1
    %p69 = scmp.ne.s32.totalorder %s64, %s66
    %p70 = scmp.eq.s32.totalorder %s9, 0
    %p71 = por %p69, %p70
    %p72 = scmp.ne.s32.totalorder %s64, %s66
    %p73 = scmp.eq.s32.totalorder %s14, 1
    %p74 = por %p72, %p73
    %p75 = scmp.ne.s32.totalorder %s66, %s67
    %p76 = scmp.eq.s32.totalorder %s14, 0
    %p77 = por %p75, %p76
    %p78 = scmp.ne.s32.totalorder %s66, %s67
    %p79 = scmp.eq.s32.totalorder %s15, 1
    %p80 = por %p78, %p79
    %p82 = scmp.ne.s32.totalorder %s67, %s81
    %p83 = scmp.eq.s32.totalorder %s15, 0
    %p84 = por %p82, %p83
    %s85 = ssub.s32 %s9, %s16
    %p86 = scmp.eq.s32.totalorder %s85, 0
    %s88 = sadd.s32 %s87, 1
    %s89 = scalar_select %p86, %s87, %s88
    %p92 = pneg %p86
    %p93 = scmp.eq.s32.totalorder %s9, 1
    %p94 = por %p92, %p93
    %p95 = scmp.ne.s32.totalorder %s87, %s90
    %p96 = scmp.eq.s32.totalorder %s9, 0
    %p97 = por %p95, %p96
    %p98 = scmp.ne.s32.totalorder %s87, %s90
    %p99 = scmp.eq.s32.totalorder %s14, 1
    %p100 = por %p98, %p99
    %p101 = scmp.ne.s32.totalorder %s90, %s91
    %p102 = scmp.eq.s32.totalorder %s14, 0
    %p103 = por %p101, %p102
    %p104 = scmp.ne.s32.totalorder %s90, %s91
    %p105 = scmp.eq.s32.totalorder %s15, 1
    %p106 = por %p104, %p105
    %p108 = scmp.ne.s32.totalorder %s91, %s107
    %p109 = scmp.eq.s32.totalorder %s15, 0
    %p110 = por %p108, %p109
    %p111 = scmp.le.s32.totalorder 1, %s9
    %p112 = scmp.lt.s32.totalorder %s9, 3
    %p113 = pnand %p111, %p112
    %p114 = pneg %p113
    // Predicated region
    $region9: #{gen_block.3} parent=5 // pred_check
      _
    $region10: #{gen_block.3} parent=5 // pred_check_branch
      %116 = sbr.rel (%p113) target = $region12
    $region11: #{gen_block.3} parent=5 // pred_region
      %s117 = ssub.s32 %s9, 1
      // Predicated region
      $region13: #{gen_block.3} parent=11 // pred_check
        %p118 = pneg %p56
      $region14: #{gen_block.3} parent=11 // pred_check_branch
        %120 = sbr.rel (%p118) target = $region16
      $region15: #{gen_block.3} parent=11 // pred_region
        _
      $region16: #{gen_block.3} parent=11 // pred_fallthru
        _
      // Predicated region
      $region17: #{gen_block.3} parent=11 // pred_check
        %p121 = pneg %p77
      $region18: #{gen_block.3} parent=11 // pred_check_branch
        %123 = sbr.rel (%p121) target = $region20
      $region19: #{gen_block.3} parent=11 // pred_region
        _
      $region20: #{gen_block.3} parent=11 // pred_fallthru
        _
    $region12: #{gen_block.3} parent=5 // pred_fallthru
      _
    %p124 = scmp.lt.s32.totalorder %s9, 2
    // Predicated region
    $region21: #{gen_block.3} parent=5 // pred_check
      %p125 = pneg %p124
    $region22: #{gen_block.3} parent=5 // pred_check_branch
      %127 = sbr.rel (%p125) target = $region24
    $region23: #{gen_block.3} parent=5 // pred_region
      // Predicated region
      $region25: #{gen_block.3} parent=23 // pred_check
        %p128 = pneg %p29
      $region26: #{gen_block.3} parent=23 // pred_check_branch
        %130 = sbr.rel (%p128) target = $region28
      $region27: #{gen_block.3} parent=23 // pred_region
        %p131 = scmp.lt.s32.totalorder %s9, 1
        %s132 = scalar_select %p131, %s9, 1
        %s133 = smul.addr %s132, 6
        %s134 = smul.addr %s133, 8
        %s135 = scalar_lea.vmem %s0, %s134
      $region28: #{gen_block.3} parent=23 // pred_fallthru
        _
    $region24: #{gen_block.3} parent=5 // pred_fallthru
      _
    %p136 = scmp.le.s32.totalorder 1, %s9
    %p137 = scmp.lt.s32.totalorder %s9, 3
    %p138 = pnand %p136, %p137
    %p139 = pneg %p138
    // Predicated region
    $region29: #{gen_block.3} parent=5 // pred_check
      _
    $region30: #{gen_block.3} parent=5 // pred_check_branch
      %141 = sbr.rel (%p138) target = $region32
    $region31: #{gen_block.3} parent=5 // pred_region
      %s142 = ssub.s32 %s9, 1
      %p143 = scmp.lt.s32.totalorder %s14, 1
      %s144 = scalar_select %p143, %s14, 1
      %s145 = smul.addr %s144, 6
      %s146 = smul.addr %s145, 8
      %s147 = scalar_lea.vmem %s0, %s146
      %p148 = pneg %p35
      %p149 = pneg %p32
      %p150 = pneg %p56
      %p151 = pneg %p53
      %p152 = pneg %p77
      %p153 = pneg %p74
      %p154 = pneg %p103
      %p155 = pneg %p100
      %p156 = scmp.lt.s32.totalorder %s14, 1
      %s157 = scalar_select %p156, %s14, 1
      %s158 = smul.addr %s157, 6
      %s159 = smul.addr %s158, 8
      %s160 = scalar_lea.vmem %s3, %s159
      %p161 = scmp.lt.s32.totalorder %s14, 1
      %s162 = scalar_select %p161, %s14, 1
      %s163 = smul.addr %s162, 6
      %s164 = smul.addr %s163, 8
      %s165 = scalar_lea.vmem %s0, %s164
      %p166 = scmp.lt.s32.totalorder %s14, 1
      %s167 = scalar_select %p166, %s14, 1
      %s168 = smul.addr %s167, 6
      %s169 = smul.addr %s168, 8
      %s170 = scalar_lea.vmem %s3, %s169
      %v171 = vld [vmem:[%s165] sm:$0xff]
      %v172 = vld [vmem:[%s165 + $0x8] sm:$0xff]
      %v173 = vld [vmem:[%s165 + $0x10] sm:$0xff]
      %v174 = vld [vmem:[%s165 + $0x18] sm:$0xff]
      %v175 = vld [vmem:[%s165 + $0x20] sm:$0x3]
      %v176 = vld [vmem:[%s165 + $0x28] sm:$0x3]
      %v177 = vld [vmem:[%s1] sm:$0x3]
      %v179 = vlaneseq
      %v180 = vshrl.u32 %v179, 7
      %v181 = vsub.s32 0, %v180
      %v182 = vrot.slane %v177, %v181
      %v183 = vlaneseq
      %v184 = vshrl.u32 %v183, 7
      %v185 = vsub.s32 1, %v184
      %v186 = vrot.slane %v177, %v185
      %v189 = vmul.f32 %v171, %v182
      %v190 = vmul.f32 %v172, %v186
      %v191 = vmul.f32 %v173, %v182
      %v192 = vmul.f32 %v174, %v186
      %v193 = vmul.f32 %v175, %v182
      %v194 = vmul.f32 %v176, %v186
      %v195 = vld [vmem:[%s2] sm:$0x3]
      %v197 = vlaneseq
      %v198 = vshrl.u32 %v197, 7
      %v199 = vsub.s32 0, %v198
      %v200 = vrot.slane %v195, %v199
      %v201 = vlaneseq
      %v202 = vshrl.u32 %v201, 7
      %v203 = vsub.s32 1, %v202
      %v204 = vrot.slane %v195, %v203
      %v207 = vadd.f32 %v189, %v200
      %v208 = vadd.f32 %v190, %v204
      %v209 = vadd.f32 %v191, %v200
      %v210 = vadd.f32 %v192, %v204
      %v211 = vadd.f32 %v193, %v200
      %v212 = vadd.f32 %v194, %v204
      %v213 = vmax.f32 %v207, 0.0
      %v214 = vmax.f32 %v208, 0.0
      %v215 = vmax.f32 %v209, 0.0
      %v216 = vmax.f32 %v210, 0.0
      %v217 = vmax.f32 %v211, 0.0
      %v218 = vmax.f32 %v212, 0.0
      %219 = vst [vmem:[%s170] sm:$0xff] %v213
      %vm220 = vcmask 130048
      %221 = vst.msk [vmem:[%s170 + $0x8] sm:$0xff] %vm220, %v214
      %222 = vst [vmem:[%s170 + $0x10] sm:$0xff] %v215
      %223 = vst.msk [vmem:[%s170 + $0x18] sm:$0xff] %vm220, %v216
      %224 = vst [vmem:[%s170 + $0x20] sm:$0x3] %v217
      %vm225 = vcmask 123904
      %226 = vst.msk [vmem:[%s170 + $0x28] sm:$0x3] %vm225, %v218
      %p227 = scmp.lt.s32.totalorder %s14, 1
      %s228 = scalar_select %p227, %s14, 1
      %s229 = smul.addr %s228, 6
      %s230 = smul.addr %s229, 8
      %s231 = scalar_lea.vmem %s3, %s230
      // Predicated region
      $region33: #{gen_block.3} parent=31 // pred_check
        %p232 = pneg %p100
      $region34: #{gen_block.3} parent=31 // pred_check_branch
        %234 = sbr.rel (%p232) target = $region36
      $region35: #{gen_block.3} parent=31 // pred_region
        _
      $region36: #{gen_block.3} parent=31 // pred_fallthru
        _
    $region32: #{gen_block.3} parent=5 // pred_fallthru
      _
    %p235 = scmp.le.s32.totalorder 2, %s9
    // Predicated region
    $region37: #{gen_block.3} parent=5 // pred_check
      %p236 = pneg %p235
    $region38: #{gen_block.3} parent=5 // pred_check_branch
      %238 = sbr.rel (%p236) target = $region40
    $region39: #{gen_block.3} parent=5 // pred_region
      %s239 = ssub.s32 %s9, 2
      // Predicated region
      $region41: #{gen_block.3} parent=39 // pred_check
        %p240 = pneg %p106
      $region42: #{gen_block.3} parent=39 // pred_check_branch
        %242 = sbr.rel (%p240) target = $region44
      $region43: #{gen_block.3} parent=39 // pred_region
        %p243 = scmp.lt.s32.totalorder %s15, 1
        %s244 = scalar_select %p243, %s15, 1
        %s245 = smul.addr %s244, 6
        %s246 = smul.addr %s245, 8
        %s247 = scalar_lea.vmem %s3, %s246
      $region44: #{gen_block.3} parent=39 // pred_fallthru
        _
    $region40: #{gen_block.3} parent=5 // pred_fallthru
      _
  $region6: #{gen_block.3} parent=0 // loop_footer
    %s13 = sadd.s32 1, %s9
  $region7: #{gen_block.3} parent=0 // loop_footer_branch
    %8 = sbr.rel target = $region3
  $region8: #{gen_block.3} parent=0 // loop_exit
    _

// kernel: gen_block.2
$region0: #{gen_block.2}
  #allocation0 [shape = 'u32[]', space=smem, size = 0x4, offset = 0x4, fixed_abs, tag = 'smem constant byte address 0x4 - core index']
  #allocation1 [shape = 'u32[144,128]{1,0:T(1,128)}', space=vmem, size = 0x12000, scoped, tag = 'internal scratch']
  %s0 = inlined_call_operand.vmem [shape: bf16[128,16], index: 0, kind: input, shape index: {}]
  %s1 = inlined_call_operand.vmem [shape: bf16[16,128], index: 1, kind: input, shape index: {}]
  %s2 = inlined_call_operand.vmem [shape: f32[2,18,9,16], index: 2, kind: output, shape index: {0}]
  %s3 = inlined_call_operand.vmem [shape: f32[2,2,16], index: 3, kind: output, shape index: {1}]
  %4 = xla_tuple %s2, %s3
  %s5 = sld [smem:[#allocation0]]
  $region49: #{gen_block.2} parent=0
    _
  %s7 = ssub.s32 1, %s5
  %s8 = scalar_select 0, %s7, %s5
  loop: start=0, step=1, limit=4
  $region2: #{gen_block.2} parent=0 // loop_pre_header
    _
  $region3: #{gen_block.2} parent=0 // loop_header
    %s10 = sphi 0, %s14
    %p11 = scmp.ge.s32.totalorder %s10, 4
    %s20 = sphi 0, %s22
    %s23 = sphi 0, %s20
    %s24 = sphi 0, %s23
    %s40 = sphi 0, %s24
    %s44 = sphi 0, %s44
    %s46 = sphi 0, %s44
    %s47 = sphi 0, %s46
    %s61 = sphi 0, %s47
    %s67 = sphi 0, %s69
    %s70 = sphi 0, %s67
    %s71 = sphi 0, %s70
    %s87 = sphi 0, %s71
    %s93 = sphi 0, %s95
    %s96 = sphi 0, %s93
    %s97 = sphi 0, %s96
    %s113 = sphi 0, %s97
  $region4: #{gen_block.2} parent=0 // loop_header_branch
    %13 = sbr.rel (%p11) target = $region8
  $region5: #{gen_block.2} parent=0 // loop_body
    %s15 = ssub.s32 %s10, 1
    %s16 = ssub.s32 %s10, 2
    %s17 = sadd.s32 %s10, 1
    %s18 = ssub.s32 %s10, %s17
    %p19 = scmp.eq.s32.totalorder %s18, 0
    %s21 = sadd.s32 %s20, 1
    %s22 = scalar_select %p19, %s20, %s21
    %p25 = pneg %p19
    %p26 = scmp.eq.s32.totalorder %s10, 1
    %p27 = por %p25, %p26
    %p28 = scmp.ne.s32.totalorder %s20, %s23
    %p29 = scmp.eq.s32.totalorder %s10, 0
    %p30 = por %p28, %p29
    %p31 = scmp.ne.s32.totalorder %s20, %s23
    %p32 = scmp.eq.s32.totalorder %s15, 1
    %p33 = por %p31, %p32
    %p34 = scmp.ne.s32.totalorder %s23, %s24
    %p35 = scmp.eq.s32.totalorder %s15, 0
    %p36 = por %p34, %p35
    %p37 = scmp.ne.s32.totalorder %s23, %s24
    %p38 = scmp.eq.s32.totalorder %s16, 1
    %p39 = por %p37, %p38
    %p41 = scmp.ne.s32.totalorder %s24, %s40
    %p42 = scmp.eq.s32.totalorder %s16, 0
    %p43 = por %p41, %p42
    %s45 = sadd.s32 %s44, 1
    %p48 = scmp.eq.s32.totalorder %s10, 1
    %p49 = scmp.ne.s32.totalorder %s44, %s46
    %p50 = scmp.eq.s32.totalorder %s10, 0
    %p51 = por %p49, %p50
    %p52 = scmp.ne.s32.totalorder %s44, %s46
    %p53 = scmp.eq.s32.totalorder %s15, 1
    %p54 = por %p52, %p53
    %p55 = scmp.ne.s32.totalorder %s46, %s47
    %p56 = scmp.eq.s32.totalorder %s15, 0
    %p57 = por %p55, %p56
    %p58 = scmp.ne.s32.totalorder %s46, %s47
    %p59 = scmp.eq.s32.totalorder %s16, 1
    %p60 = por %p58, %p59
    %p62 = scmp.ne.s32.totalorder %s47, %s61
    %p63 = scmp.eq.s32.totalorder %s16, 0
    %p64 = por %p62, %p63
    %s65 = ssub.s32 %s10, %s17
    %p66 = scmp.eq.s32.totalorder %s65, 0
    %s68 = sadd.s32 %s67, 1
    %s69 = scalar_select %p66, %s67, %s68
    %p72 = pneg %p66
    %p73 = scmp.eq.s32.totalorder %s10, 1
    %p74 = por %p72, %p73
    %p75 = scmp.ne.s32.totalorder %s67, %s70
    %p76 = scmp.eq.s32.totalorder %s10, 0
    %p77 = por %p75, %p76
    %p78 = scmp.ne.s32.totalorder %s67, %s70
    %p79 = scmp.eq.s32.totalorder %s15, 1
    %p80 = por %p78, %p79
    %p81 = scmp.ne.s32.totalorder %s70, %s71
    %p82 = scmp.eq.s32.totalorder %s15, 0
    %p83 = por %p81, %p82
    %p84 = scmp.ne.s32.totalorder %s70, %s71
    %p85 = scmp.eq.s32.totalorder %s16, 1
    %p86 = por %p84, %p85
    %p88 = scmp.ne.s32.totalorder %s71, %s87
    %p89 = scmp.eq.s32.totalorder %s16, 0
    %p90 = por %p88, %p89
    %s91 = ssub.s32 %s10, %s17
    %p92 = scmp.eq.s32.totalorder %s91, 0
    %s94 = sadd.s32 %s93, 1
    %s95 = scalar_select %p92, %s93, %s94
    %p98 = pneg %p92
    %p99 = scmp.eq.s32.totalorder %s10, 1
    %p100 = por %p98, %p99
    %p101 = scmp.ne.s32.totalorder %s93, %s96
    %p102 = scmp.eq.s32.totalorder %s10, 0
    %p103 = por %p101, %p102
    %p104 = scmp.ne.s32.totalorder %s93, %s96
    %p105 = scmp.eq.s32.totalorder %s15, 1
    %p106 = por %p104, %p105
    %p107 = scmp.ne.s32.totalorder %s96, %s97
    %p108 = scmp.eq.s32.totalorder %s15, 0
    %p109 = por %p107, %p108
    %p110 = scmp.ne.s32.totalorder %s96, %s97
    %p111 = scmp.eq.s32.totalorder %s16, 1
    %p112 = por %p110, %p111
    %p114 = scmp.ne.s32.totalorder %s97, %s113
    %p115 = scmp.eq.s32.totalorder %s16, 0
    %p116 = por %p114, %p115
    %p117 = scmp.le.s32.totalorder 1, %s10
    %p118 = scmp.lt.s32.totalorder %s10, 3
    %p119 = pnand %p117, %p118
    %p120 = pneg %p119
    // Predicated region
    $region9: #{gen_block.2} parent=5 // pred_check
      _
    $region10: #{gen_block.2} parent=5 // pred_check_branch
      %122 = sbr.rel (%p119) target = $region12
    $region11: #{gen_block.2} parent=5 // pred_region
      %s123 = ssub.s32 %s10, 1
      // Predicated region
      $region13: #{gen_block.2} parent=11 // pred_check
        %p124 = pneg %p57
      $region14: #{gen_block.2} parent=11 // pred_check_branch
        %126 = sbr.rel (%p124) target = $region16
      $region15: #{gen_block.2} parent=11 // pred_region
        _
      $region16: #{gen_block.2} parent=11 // pred_fallthru
        _
    $region12: #{gen_block.2} parent=5 // pred_fallthru
      _
    %p127 = scmp.lt.s32.totalorder %s10, 2
    // Predicated region
    $region17: #{gen_block.2} parent=5 // pred_check
      %p128 = pneg %p127
    $region18: #{gen_block.2} parent=5 // pred_check_branch
      %130 = sbr.rel (%p128) target = $region20
    $region19: #{gen_block.2} parent=5 // pred_region
      // Predicated region
      $region21: #{gen_block.2} parent=19 // pred_check
        %p131 = pneg %p30
      $region22: #{gen_block.2} parent=19 // pred_check_branch
        %133 = sbr.rel (%p131) target = $region24
      $region23: #{gen_block.2} parent=19 // pred_region
        %s134 = smul.u32 8, %s10
        %p135 = scmp.lt.s32.totalorder %s134, 15
        %s136 = scalar_select %p135, %s134, 15
        %s137 = smul.addr %s136, 4
        %s138 = scalar_lea.vmem %s0, %s137
        %s139 = smul.u32 8, %s10
      $region24: #{gen_block.2} parent=19 // pred_fallthru
        _
    $region20: #{gen_block.2} parent=5 // pred_fallthru
      _
    %p140 = scmp.le.s32.totalorder 1, %s10
    %p141 = scmp.lt.s32.totalorder %s10, 3
    %p142 = pnand %p140, %p141
    %p143 = pneg %p142
    // Predicated region
    $region25: #{gen_block.2} parent=5 // pred_check
      _
    $region26: #{gen_block.2} parent=5 // pred_check_branch
      %145 = sbr.rel (%p142) target = $region28
    $region27: #{gen_block.2} parent=5 // pred_region
      %s146 = ssub.s32 %s10, 1
      %s147 = smul.u32 8, %s15
      %p148 = scmp.lt.s32.totalorder %s147, 15
      %s149 = scalar_select %p148, %s147, 15
      %s150 = smul.addr %s149, 4
      %s151 = scalar_lea.vmem %s0, %s150
      %p152 = pneg %p36
      %p153 = pneg %p33
      %p154 = pneg %p57
      %p155 = pneg %p54
      %p156 = pneg %p83
      %p157 = pneg %p80
      %p158 = scmp.lt.s32.totalorder %s15, 1
      %s159 = scalar_select %p158, %s15, 1
      %s160 = smul.addr %s159, 36
      %s161 = smul.addr %s160, 8
      %s162 = scalar_lea.vmem %s2, %s161
      %p163 = pneg %p109
      %p164 = pneg %p106
      %p165 = scmp.lt.s32.totalorder %s15, 1
      %s166 = scalar_select %p165, %s15, 1
      %s167 = smul.addr %s166, 2
      %s168 = scalar_lea.vmem %s3, %s167
      %s169 = smul.u32 8, %s15
      %p170 = scmp.lt.s32.totalorder %s169, 15
      %s171 = scalar_select %p170, %s169, 15
      %s172 = smul.addr %s171, 4
      %s173 = scalar_lea.vmem %s0, %s172
      %s174 = smul.u32 8, %s15
      %p175 = scmp.lt.s32.totalorder %s15, 1
      %s176 = scalar_select %p175, %s15, 1
      %s177 = smul.addr %s176, 36
      %s178 = smul.addr %s177, 8
      %s179 = scalar_lea.vmem %s2, %s178
      %p180 = scmp.lt.s32.totalorder %s15, 1
      %s181 = scalar_select %p180, %s15, 1
      %s182 = smul.addr %s181, 2
      %s183 = scalar_lea.vmem %s3, %s182
      %v185 = vld [vmem:[%s173] sm:$0xf]
      %v186 = vld [vmem:[%s173 + $0x4] sm:$0xf]
      %v187 = vld [vmem:[%s173 + $0x8] sm:$0xf]
      %v188 = vld [vmem:[%s173 + $0xc] sm:$0xf]
      %v189 = vld [vmem:[%s173 + $0x10] sm:$0xf]
      %v190 = vld [vmem:[%s173 + $0x14] sm:$0xf]
      %v191 = vld [vmem:[%s173 + $0x18] sm:$0xf]
      %v192 = vld [vmem:[%s173 + $0x1c] sm:$0xf]
      %v193 = vld [vmem:[%s1] sm:$0xf]
      %v194 = vld [vmem:[%s1 + $0x4] sm:$0xf]
      %v203 = vunpack.c.l.b16 %v185
      %v204 = vunpack.c.l.b16 %v186
      %v205 = vunpack.c.l.b16 %v187
      %v206 = vunpack.c.l.b16 %v188
      %v207 = vunpack.c.l.b16 %v189
      %v208 = vunpack.c.l.b16 %v190
      %v209 = vunpack.c.l.b16 %v191
      %v210 = vunpack.c.l.b16 %v192
      %v211 = vpack.c.b16 %v204, %v203
      %v212 = vpack.c.b16 %v206, %v205
      %v213 = vpack.c.b16 %v208, %v207
      %v214 = vpack.c.b16 %v210, %v209
      %v217 = vunpack.c.l.b16 %v193
      %v218 = vunpack.c.l.b16 %v194
      %v219 = vpack.c.b16 %v218, %v217
      %vm221 = vcmask 130048
      %v223 = vsel %vm221, %v211, 0
      %v226 = vsel %vm221, %v212, 0
      %v229 = vsel %vm221, %v213, 0
      %v232 = vsel %vm221, %v214, 0
      %234 = vmatprep.subr.bf16.mxu0 0
      %235 = vmatpush1.bf16.msra.mxu0 %v219
      %236 = vmatprep.subr.bf16.mxu0 0
      %237 = vmatpush1.bf16.msra.mxu0 0
      %238 = vmatprep.subr.bf16.mxu0 0
      %239 = vmatpush1.bf16.msra.mxu0 0
      %240 = vmatprep.subr.bf16.mxu0 0
      %241 = vmatpush1.bf16.msra.mxu0 0
      %242 = vmatprep.subr.bf16.mxu0 0
      %243 = vmatpush1.bf16.msra.mxu0 0
      %244 = vmatprep.subr.bf16.mxu0 0
      %245 = vmatpush1.bf16.msra.mxu0 0
      %246 = vmatprep.subr.bf16.mxu0 0
      %247 = vmatpush1.bf16.msra.mxu0 0
      %248 = vmatprep.subr.bf16.mxu0 0
      %249 = vmatpush1.bf16.msra.mxu0 0
      %250 = vmatprep.subr.bf16.mxu0 0
      %251 = vmatpush1.bf16.msra.mxu0 0
      %252 = vmatprep.subr.bf16.mxu0 0
      %253 = vmatpush1.bf16.msra.mxu0 0
      %254 = vmatprep.subr.bf16.mxu0 0
      %255 = vmatpush1.bf16.msra.mxu0 0
      %256 = vmatprep.subr.bf16.mxu0 0
      %257 = vmatpush1.bf16.msra.mxu0 0
      %258 = vmatprep.subr.bf16.mxu0 0
      %259 = vmatpush1.bf16.msra.mxu0 0
      %260 = vmatprep.subr.bf16.mxu0 0
      %261 = vmatpush1.bf16.msra.mxu0 0
      %262 = vmatprep.subr.bf16.mxu0 0
      %263 = vmatpush1.bf16.msra.mxu0 0
      %264 = vmatprep.subr.bf16.mxu0 0
      %265 = vmatpush1.bf16.msra.mxu0 0
      %266 = vmatprep.mubr.bf16.mxu0 0
      %267 = vmatmul.mubr.bf16.gmra.mrb[0].mxu0 %v223
      %v268 = vpop.f32.mrb[0].mxu0
      %v269 = vadd.f32 0.0, %v268
      %v270 = vpop.f32.mrb[0].mxu0
      %v271 = vpop.f32.mrb[0].mxu0
      %v272 = vadd.f32 0.0, %v271
      %v273 = vpop.f32.mrb[0].mxu0
      %274 = vmatprep.mubr.bf16.mxu0 0
      %275 = vmatmul.mubr.bf16.gmra.mrb[0].mxu0 %v226
      %v276 = vpop.f32.mrb[0].mxu0
      %v277 = vadd.f32 0.0, %v276
      %v278 = vpop.f32.mrb[0].mxu0
      %v279 = vpop.f32.mrb[0].mxu0
      %v280 = vadd.f32 0.0, %v279
      %v281 = vpop.f32.mrb[0].mxu0
      %282 = vmatprep.mubr.bf16.mxu0 0
      %283 = vmatmul.mubr.bf16.gmra.mrb[0].mxu0 %v229
      %v284 = vpop.f32.mrb[0].mxu0
      %v285 = vadd.f32 0.0, %v284
      %v286 = vpop.f32.mrb[0].mxu0
      %v287 = vpop.f32.mrb[0].mxu0
      %v288 = vadd.f32 0.0, %v287
      %v289 = vpop.f32.mrb[0].mxu0
      %290 = vmatprep.mubr.bf16.mxu0 0
      %291 = vmatmul.mubr.bf16.gmra.mrb[0].mxu0 %v232
      %v292 = vpop.f32.mrb[0].mxu0
      %v293 = vadd.f32 0.0, %v292
      %v294 = vpop.f32.mrb[0].mxu0
      %v295 = vpop.f32.mrb[0].mxu0
      %v296 = vadd.f32 0.0, %v295
      %v297 = vpop.f32.mrb[0].mxu0
      %298 = vdwg.mxu0
      %v307 = vrot.slane %v269, 7
      %v308 = vrot.slane %v272, 7
      %v309 = vrot.slane %v277, 7
      %v310 = vrot.slane %v280, 7
      %v311 = vrot.slane %v285, 7
      %v312 = vrot.slane %v288, 7
      %v313 = vrot.slane %v293, 7
      %v314 = vrot.slane %v296, 7
      %315 = vrot.lane.b32.xlu0 %v307, 112
      %v316 = vpop.permute.xlu0 %315
      %317 = vrot.lane.b32.xlu0 %v308, 112
      %v318 = vpop.permute.xlu0 %317
      %319 = vrot.lane.b32.xlu0 %v309, 112
      %v320 = vpop.permute.xlu0 %319
      %321 = vrot.lane.b32.xlu0 %v310, 112
      %v322 = vpop.permute.xlu0 %321
      %323 = vrot.lane.b32.xlu0 %v311, 112
      %v324 = vpop.permute.xlu0 %323
      %325 = vrot.lane.b32.xlu0 %v312, 112
      %v326 = vpop.permute.xlu0 %325
      %327 = vrot.lane.b32.xlu0 %v313, 112
      %v328 = vpop.permute.xlu0 %327
      %329 = vrot.lane.b32.xlu0 %v314, 112
      %v330 = vpop.permute.xlu0 %329
      %vm339 = vcmask 1040384
      %v340 = vsel %vm339, 0.0, %v316
      %v341 = vsel %vm339, 0.0, %v318
      %v342 = vsel %vm339, 0.0, %v320
      %v343 = vsel %vm339, 0.0, %v322
      %v344 = vsel %vm339, 0.0, %v324
      %v345 = vsel %vm339, 0.0, %v326
      %v346 = vsel %vm339, 0.0, %v328
      %v347 = vsel %vm339, 0.0, %v330
      %v348 = vadd.f32 %v269, %v340
      %v349 = vadd.f32 %v316, 0.0
      %v350 = vadd.f32 %v272, %v341
      %v351 = vadd.f32 %v318, 0.0
      %v352 = vadd.f32 %v277, %v342
      %v353 = vadd.f32 %v320, 0.0
      %v354 = vadd.f32 %v280, %v343
      %v355 = vadd.f32 %v322, 0.0
      %v356 = vadd.f32 %v285, %v344
      %v357 = vadd.f32 %v324, 0.0
      %v358 = vadd.f32 %v288, %v345
      %v359 = vadd.f32 %v326, 0.0
      %v360 = vadd.f32 %v293, %v346
      %v361 = vadd.f32 %v328, 0.0
      %v362 = vadd.f32 %v296, %v347
      %v363 = vadd.f32 %v330, 0.0
      %364 = vrot.lane.b32.xlu0 %v307, 80
      %v365 = vpop.permute.xlu0 %364
      %366 = vrot.lane.b32.xlu0 %v308, 80
      %v367 = vpop.permute.xlu0 %366
      %368 = vrot.lane.b32.xlu0 %v309, 80
      %v369 = vpop.permute.xlu0 %368
      %370 = vrot.lane.b32.xlu0 %v310, 80
      %v371 = vpop.permute.xlu0 %370
      %372 = vrot.lane.b32.xlu0 %v311, 80
      %v373 = vpop.permute.xlu0 %372
      %374 = vrot.lane.b32.xlu0 %v312, 80
      %v375 = vpop.permute.xlu0 %374
      %376 = vrot.lane.b32.xlu0 %v313, 80
      %v377 = vpop.permute.xlu0 %376
      %378 = vrot.lane.b32.xlu0 %v314, 80
      %v379 = vpop.permute.xlu0 %378
      %v388 = vsel %vm339, 0.0, %v365
      %v389 = vsel %vm339, 0.0, %v367
      %v390 = vsel %vm339, 0.0, %v369
      %v391 = vsel %vm339, 0.0, %v371
      %v392 = vsel %vm339, 0.0, %v373
      %v393 = vsel %vm339, 0.0, %v375
      %v394 = vsel %vm339, 0.0, %v377
      %v395 = vsel %vm339, 0.0, %v379
      %404 = vrot.lane.b32.xlu0 %v388, 32
      %v405 = vpop.permute.xlu0 %404
      %406 = vrot.lane.b32.xlu0 %v365, 32
      %v407 = vpop.permute.xlu0 %406
      %408 = vrot.lane.b32.xlu0 %v389, 32
      %v409 = vpop.permute.xlu0 %408
      %410 = vrot.lane.b32.xlu0 %v367, 32
      %v411 = vpop.permute.xlu0 %410
      %412 = vrot.lane.b32.xlu0 %v390, 32
      %v413 = vpop.permute.xlu0 %412
      %414 = vrot.lane.b32.xlu0 %v369, 32
      %v415 = vpop.permute.xlu0 %414
      %416 = vrot.lane.b32.xlu0 %v391, 32
      %v417 = vpop.permute.xlu0 %416
      %418 = vrot.lane.b32.xlu0 %v371, 32
      %v419 = vpop.permute.xlu0 %418
      %420 = vrot.lane.b32.xlu0 %v392, 32
      %v421 = vpop.permute.xlu0 %420
      %422 = vrot.lane.b32.xlu0 %v373, 32
      %v423 = vpop.permute.xlu0 %422
      %424 = vrot.lane.b32.xlu0 %v393, 32
      %v425 = vpop.permute.xlu0 %424
      %426 = vrot.lane.b32.xlu0 %v375, 32
      %v427 = vpop.permute.xlu0 %426
      %428 = vrot.lane.b32.xlu0 %v394, 32
      %v429 = vpop.permute.xlu0 %428
      %430 = vrot.lane.b32.xlu0 %v377, 32
      %v431 = vpop.permute.xlu0 %430
      %432 = vrot.lane.b32.xlu0 %v395, 32
      %v433 = vpop.permute.xlu0 %432
      %434 = vrot.lane.b32.xlu0 %v379, 32
      %v435 = vpop.permute.xlu0 %434
      %v452 = vadd.f32 %v269, %v405
      %v453 = vadd.f32 %v407, 0.0
      %v454 = vadd.f32 %v272, %v409
      %v455 = vadd.f32 %v411, 0.0
      %v456 = vadd.f32 %v277, %v413
      %v457 = vadd.f32 %v415, 0.0
      %v458 = vadd.f32 %v280, %v417
      %v459 = vadd.f32 %v419, 0.0
      %v460 = vadd.f32 %v285, %v421
      %v461 = vadd.f32 %v423, 0.0
      %v462 = vadd.f32 %v288, %v425
      %v463 = vadd.f32 %v427, 0.0
      %v464 = vadd.f32 %v293, %v429
      %v465 = vadd.f32 %v431, 0.0
      %v466 = vadd.f32 %v296, %v433
      %v467 = vadd.f32 %v435, 0.0
      %484 = vrot.lane.b32.xlu0 %v452, 96
      %v485 = vpop.permute.xlu0 %484
      %486 = vrot.lane.b32.xlu0 %v453, 96
      %v487 = vpop.permute.xlu0 %486
      %488 = vrot.lane.b32.xlu0 %v454, 96
      %v489 = vpop.permute.xlu0 %488
      %490 = vrot.lane.b32.xlu0 %v455, 96
      %v491 = vpop.permute.xlu0 %490
      %492 = vrot.lane.b32.xlu0 %v456, 96
      %v493 = vpop.permute.xlu0 %492
      %494 = vrot.lane.b32.xlu0 %v457, 96
      %v495 = vpop.permute.xlu0 %494
      %496 = vrot.lane.b32.xlu0 %v458, 96
      %v497 = vpop.permute.xlu0 %496
      %498 = vrot.lane.b32.xlu0 %v459, 96
      %v499 = vpop.permute.xlu0 %498
      %500 = vrot.lane.b32.xlu0 %v460, 96
      %v501 = vpop.permute.xlu0 %500
      %502 = vrot.lane.b32.xlu0 %v461, 96
      %v503 = vpop.permute.xlu0 %502
      %504 = vrot.lane.b32.xlu0 %v462, 96
      %v505 = vpop.permute.xlu0 %504
      %506 = vrot.lane.b32.xlu0 %v463, 96
      %v507 = vpop.permute.xlu0 %506
      %508 = vrot.lane.b32.xlu0 %v464, 96
      %v509 = vpop.permute.xlu0 %508
      %510 = vrot.lane.b32.xlu0 %v465, 96
      %v511 = vpop.permute.xlu0 %510
      %512 = vrot.lane.b32.xlu0 %v466, 96
      %v513 = vpop.permute.xlu0 %512
      %514 = vrot.lane.b32.xlu0 %v467, 96
      %v515 = vpop.permute.xlu0 %514
      %v532 = vadd.f32 %v348, 0.0
      %v533 = vadd.f32 %v349, 0.0
      %v534 = vadd.f32 %v350, %v485
      %v535 = vadd.f32 %v351, %v487
      %v536 = vadd.f32 %v352, %v489
      %v537 = vadd.f32 %v353, %v491
      %v538 = vadd.f32 %v354, %v493
      %v539 = vadd.f32 %v355, %v495
      %v540 = vadd.f32 %v356, %v497
      %v541 = vadd.f32 %v357, %v499
      %v542 = vadd.f32 %v358, %v501
      %v543 = vadd.f32 %v359, %v503
      %v544 = vadd.f32 %v360, %v505
      %v545 = vadd.f32 %v361, %v507
      %v546 = vadd.f32 %v362, %v509
      %v547 = vadd.f32 %v363, %v511
      %v548 = vadd.f32 %v513, 0.0
      %v549 = vadd.f32 %v515, 0.0
      %550 = vrot.lane.b32.xlu0 %v307, 48
      %v551 = vpop.permute.xlu0 %550
      %552 = vrot.lane.b32.xlu0 %v308, 48
      %v553 = vpop.permute.xlu0 %552
      %554 = vrot.lane.b32.xlu0 %v309, 48
      %v555 = vpop.permute.xlu0 %554
      %556 = vrot.lane.b32.xlu0 %v310, 48
      %v557 = vpop.permute.xlu0 %556
      %558 = vrot.lane.b32.xlu0 %v311, 48
      %v559 = vpop.permute.xlu0 %558
      %560 = vrot.lane.b32.xlu0 %v312, 48
      %v561 = vpop.permute.xlu0 %560
      %562 = vrot.lane.b32.xlu0 %v313, 48
      %v563 = vpop.permute.xlu0 %562
      %564 = vrot.lane.b32.xlu0 %v314, 48
      %v565 = vpop.permute.xlu0 %564
      %v574 = vsel %vm339, 0.0, %v551
      %v575 = vsel %vm339, 0.0, %v553
      %v576 = vsel %vm339, 0.0, %v555
      %v577 = vsel %vm339, 0.0, %v557
      %v578 = vsel %vm339, 0.0, %v559
      %v579 = vsel %vm339, 0.0, %v561
      %v580 = vsel %vm339, 0.0, %v563
      %v581 = vsel %vm339, 0.0, %v565
      %590 = vrot.lane.b32.xlu0 %v574, 64
      %v591 = vpop.permute.xlu0 %590
      %592 = vrot.lane.b32.xlu0 %v551, 64
      %v593 = vpop.permute.xlu0 %592
      %594 = vrot.lane.b32.xlu0 %v575, 64
      %v595 = vpop.permute.xlu0 %594
      %596 = vrot.lane.b32.xlu0 %v553, 64
      %v597 = vpop.permute.xlu0 %596
      %598 = vrot.lane.b32.xlu0 %v576, 64
      %v599 = vpop.permute.xlu0 %598
      %600 = vrot.lane.b32.xlu0 %v555, 64
      %v601 = vpop.permute.xlu0 %600
      %602 = vrot.lane.b32.xlu0 %v577, 64
      %v603 = vpop.permute.xlu0 %602
      %604 = vrot.lane.b32.xlu0 %v557, 64
      %v605 = vpop.permute.xlu0 %604
      %606 = vrot.lane.b32.xlu0 %v578, 64
      %v607 = vpop.permute.xlu0 %606
      %608 = vrot.lane.b32.xlu0 %v559, 64
      %v609 = vpop.permute.xlu0 %608
      %610 = vrot.lane.b32.xlu0 %v579, 64
      %v611 = vpop.permute.xlu0 %610
      %612 = vrot.lane.b32.xlu0 %v561, 64
      %v613 = vpop.permute.xlu0 %612
      %614 = vrot.lane.b32.xlu0 %v580, 64
      %v615 = vpop.permute.xlu0 %614
      %616 = vrot.lane.b32.xlu0 %v563, 64
      %v617 = vpop.permute.xlu0 %616
      %618 = vrot.lane.b32.xlu0 %v581, 64
      %v619 = vpop.permute.xlu0 %618
      %620 = vrot.lane.b32.xlu0 %v565, 64
      %v621 = vpop.permute.xlu0 %620
      %v638 = vadd.f32 %v269, %v591
      %v639 = vadd.f32 %v593, 0.0
      %v640 = vadd.f32 %v272, %v595
      %v641 = vadd.f32 %v597, 0.0
      %v642 = vadd.f32 %v277, %v599
      %v643 = vadd.f32 %v601, 0.0
      %v644 = vadd.f32 %v280, %v603
      %v645 = vadd.f32 %v605, 0.0
      %v646 = vadd.f32 %v285, %v607
      %v647 = vadd.f32 %v609, 0.0
      %v648 = vadd.f32 %v288, %v611
      %v649 = vadd.f32 %v613, 0.0
      %v650 = vadd.f32 %v293, %v615
      %v651 = vadd.f32 %v617, 0.0
      %v652 = vadd.f32 %v296, %v619
      %v653 = vadd.f32 %v621, 0.0
      %654 = vrot.lane.b32.xlu0 %v307, 16
      %v655 = vpop.permute.xlu0 %654
      %656 = vrot.lane.b32.xlu0 %v308, 16
      %v657 = vpop.permute.xlu0 %656
      %658 = vrot.lane.b32.xlu0 %v309, 16
      %v659 = vpop.permute.xlu0 %658
      %660 = vrot.lane.b32.xlu0 %v310, 16
      %v661 = vpop.permute.xlu0 %660
      %662 = vrot.lane.b32.xlu0 %v311, 16
      %v663 = vpop.permute.xlu0 %662
      %664 = vrot.lane.b32.xlu0 %v312, 16
      %v665 = vpop.permute.xlu0 %664
      %666 = vrot.lane.b32.xlu0 %v313, 16
      %v667 = vpop.permute.xlu0 %666
      %668 = vrot.lane.b32.xlu0 %v314, 16
      %v669 = vpop.permute.xlu0 %668
      %v678 = vsel %vm339, 0.0, %v655
      %v679 = vsel %vm339, 0.0, %v657
      %v680 = vsel %vm339, 0.0, %v659
      %v681 = vsel %vm339, 0.0, %v661
      %v682 = vsel %vm339, 0.0, %v663
      %v683 = vsel %vm339, 0.0, %v665
      %v684 = vsel %vm339, 0.0, %v667
      %v685 = vsel %vm339, 0.0, %v669
      %694 = vrot.lane.b32.xlu0 %v678, 96
      %v695 = vpop.permute.xlu0 %694
      %696 = vrot.lane.b32.xlu0 %v655, 96
      %v697 = vpop.permute.xlu0 %696
      %698 = vrot.lane.b32.xlu0 %v679, 96
      %v699 = vpop.permute.xlu0 %698
      %700 = vrot.lane.b32.xlu0 %v657, 96
      %v701 = vpop.permute.xlu0 %700
      %702 = vrot.lane.b32.xlu0 %v680, 96
      %v703 = vpop.permute.xlu0 %702
      %704 = vrot.lane.b32.xlu0 %v659, 96
      %v705 = vpop.permute.xlu0 %704
      %706 = vrot.lane.b32.xlu0 %v681, 96
      %v707 = vpop.permute.xlu0 %706
      %708 = vrot.lane.b32.xlu0 %v661, 96
      %v709 = vpop.permute.xlu0 %708
      %710 = vrot.lane.b32.xlu0 %v682, 96
      %v711 = vpop.permute.xlu0 %710
      %712 = vrot.lane.b32.xlu0 %v663, 96
      %v713 = vpop.permute.xlu0 %712
      %714 = vrot.lane.b32.xlu0 %v683, 96
      %v715 = vpop.permute.xlu0 %714
      %716 = vrot.lane.b32.xlu0 %v665, 96
      %v717 = vpop.permute.xlu0 %716
      %718 = vrot.lane.b32.xlu0 %v684, 96
      %v719 = vpop.permute.xlu0 %718
      %720 = vrot.lane.b32.xlu0 %v667, 96
      %v721 = vpop.permute.xlu0 %720
      %722 = vrot.lane.b32.xlu0 %v685, 96
      %v723 = vpop.permute.xlu0 %722
      %724 = vrot.lane.b32.xlu0 %v669, 96
      %v725 = vpop.permute.xlu0 %724
      %v742 = vadd.f32 %v269, %v695
      %v743 = vadd.f32 %v697, 0.0
      %v744 = vadd.f32 %v272, %v699
      %v745 = vadd.f32 %v701, 0.0
      %v746 = vadd.f32 %v277, %v703
      %v747 = vadd.f32 %v705, 0.0
      %v748 = vadd.f32 %v280, %v707
      %v749 = vadd.f32 %v709, 0.0
      %v750 = vadd.f32 %v285, %v711
      %v751 = vadd.f32 %v713, 0.0
      %v752 = vadd.f32 %v288, %v715
      %v753 = vadd.f32 %v717, 0.0
      %v754 = vadd.f32 %v293, %v719
      %v755 = vadd.f32 %v721, 0.0
      %v756 = vadd.f32 %v296, %v723
      %v757 = vadd.f32 %v725, 0.0
      %774 = vrot.lane.b32.xlu0 %v742, 32
      %v775 = vpop.permute.xlu0 %774
      %776 = vrot.lane.b32.xlu0 %v743, 32
      %v777 = vpop.permute.xlu0 %776
      %778 = vrot.lane.b32.xlu0 %v744, 32
      %v779 = vpop.permute.xlu0 %778
      %780 = vrot.lane.b32.xlu0 %v745, 32
      %v781 = vpop.permute.xlu0 %780
      %782 = vrot.lane.b32.xlu0 %v746, 32
      %v783 = vpop.permute.xlu0 %782
      %784 = vrot.lane.b32.xlu0 %v747, 32
      %v785 = vpop.permute.xlu0 %784
      %786 = vrot.lane.b32.xlu0 %v748, 32
      %v787 = vpop.permute.xlu0 %786
      %788 = vrot.lane.b32.xlu0 %v749, 32
      %v789 = vpop.permute.xlu0 %788
      %790 = vrot.lane.b32.xlu0 %v750, 32
      %v791 = vpop.permute.xlu0 %790
      %792 = vrot.lane.b32.xlu0 %v751, 32
      %v793 = vpop.permute.xlu0 %792
      %794 = vrot.lane.b32.xlu0 %v752, 32
      %v795 = vpop.permute.xlu0 %794
      %796 = vrot.lane.b32.xlu0 %v753, 32
      %v797 = vpop.permute.xlu0 %796
      %798 = vrot.lane.b32.xlu0 %v754, 32
      %v799 = vpop.permute.xlu0 %798
      %800 = vrot.lane.b32.xlu0 %v755, 32
      %v801 = vpop.permute.xlu0 %800
      %802 = vrot.lane.b32.xlu0 %v756, 32
      %v803 = vpop.permute.xlu0 %802
      %804 = vrot.lane.b32.xlu0 %v757, 32
      %v805 = vpop.permute.xlu0 %804
      %807 = vrot.lane.b32.xlu0 0.0, 64
      %v808 = vpop.permute.xlu0 %807
      %809 = vrot.lane.b32.xlu0 %v775, 64
      %v810 = vpop.permute.xlu0 %809
      %811 = vrot.lane.b32.xlu0 %v777, 64
      %v812 = vpop.permute.xlu0 %811
      %813 = vrot.lane.b32.xlu0 %v779, 64
      %v814 = vpop.permute.xlu0 %813
      %815 = vrot.lane.b32.xlu0 %v781, 64
      %v816 = vpop.permute.xlu0 %815
      %817 = vrot.lane.b32.xlu0 %v783, 64
      %v818 = vpop.permute.xlu0 %817
      %819 = vrot.lane.b32.xlu0 %v785, 64
      %v820 = vpop.permute.xlu0 %819
      %821 = vrot.lane.b32.xlu0 %v787, 64
      %v822 = vpop.permute.xlu0 %821
      %823 = vrot.lane.b32.xlu0 %v789, 64
      %v824 = vpop.permute.xlu0 %823
      %825 = vrot.lane.b32.xlu0 %v791, 64
      %v826 = vpop.permute.xlu0 %825
      %827 = vrot.lane.b32.xlu0 %v793, 64
      %v828 = vpop.permute.xlu0 %827
      %829 = vrot.lane.b32.xlu0 %v795, 64
      %v830 = vpop.permute.xlu0 %829
      %831 = vrot.lane.b32.xlu0 %v797, 64
      %v832 = vpop.permute.xlu0 %831
      %833 = vrot.lane.b32.xlu0 %v799, 64
      %v834 = vpop.permute.xlu0 %833
      %835 = vrot.lane.b32.xlu0 %v801, 64
      %v836 = vpop.permute.xlu0 %835
      %837 = vrot.lane.b32.xlu0 %v803, 64
      %v838 = vpop.permute.xlu0 %837
      %839 = vrot.lane.b32.xlu0 %v805, 64
      %v840 = vpop.permute.xlu0 %839
      %v858 = vadd.f32 %v638, %v808
      %v859 = vadd.f32 %v639, %v808
      %v860 = vadd.f32 %v640, %v810
      %v861 = vadd.f32 %v641, %v812
      %v862 = vadd.f32 %v642, %v814
      %v863 = vadd.f32 %v643, %v816
      %v864 = vadd.f32 %v644, %v818
      %v865 = vadd.f32 %v645, %v820
      %v866 = vadd.f32 %v646, %v822
      %v867 = vadd.f32 %v647, %v824
      %v868 = vadd.f32 %v648, %v826
      %v869 = vadd.f32 %v649, %v828
      %v870 = vadd.f32 %v650, %v830
      %v871 = vadd.f32 %v651, %v832
      %v872 = vadd.f32 %v652, %v834
      %v873 = vadd.f32 %v653, %v836
      %v874 = vadd.f32 %v838, 0.0
      %v875 = vadd.f32 %v840, 0.0
      %v876 = vsel %vm221, %v532, 0.0
      %vm877 = vcmask 122880
      %v878 = vsel %vm877, %v533, 0.0
      %v879 = vadd.f32 %v876, %v878
      %v880 = vsel %vm221, %v534, 0.0
      %v881 = vadd.f32 %v879, %v880
      %v882 = vsel %vm877, %v535, 0.0
      %v883 = vadd.f32 %v881, %v882
      %v884 = vsel %vm221, %v536, 0.0
      %v885 = vadd.f32 %v883, %v884
      %v886 = vsel %vm877, %v537, 0.0
      %v887 = vadd.f32 %v885, %v886
      %v888 = vsel %vm221, %v538, 0.0
      %v889 = vadd.f32 %v887, %v888
      %v890 = vsel %vm877, %v539, 0.0
      %v891 = vadd.f32 %v889, %v890
      %v892 = vsel %vm221, %v540, 0.0
      %v893 = vadd.f32 %v891, %v892
      %v894 = vsel %vm877, %v541, 0.0
      %v895 = vadd.f32 %v893, %v894
      %v896 = vsel %vm221, %v542, 0.0
      %v897 = vadd.f32 %v895, %v896
      %v898 = vsel %vm877, %v543, 0.0
      %v899 = vadd.f32 %v897, %v898
      %v900 = vsel %vm221, %v544, 0.0
      %v901 = vadd.f32 %v899, %v900
      %v902 = vsel %vm877, %v545, 0.0
      %v903 = vadd.f32 %v901, %v902
      %v904 = vsel %vm221, %v546, 0.0
      %v905 = vadd.f32 %v903, %v904
      %v906 = vsel %vm877, %v547, 0.0
      %v907 = vadd.f32 %v905, %v906
      %v908 = vsel %vm221, %v548, 0.0
      %v909 = vadd.f32 %v907, %v908
      %v910 = vsel %vm877, %v549, 0.0
      %v911 = vadd.f32 %v909, %v910
      %v912 = vrot.slane %v911, 4
      %v913 = vadd.f32 %v911, %v912
      %v914 = vrot.slane %v913, 2
      %v915 = vadd.f32 %v913, %v914
      %v916 = vrot.slane %v915, 1
      %v917 = vadd.f32 %v915, %v916
      %vm918 = vcmask 654848
      %v919 = vsel %vm918, %v858, 0.0
      %vm920 = vcmask 647680
      %v921 = vsel %vm920, %v859, 0.0
      %v922 = vadd.f32 %v919, %v921
      %v923 = vsel %vm918, %v860, 0.0
      %v924 = vadd.f32 %v922, %v923
      %v925 = vsel %vm920, %v861, 0.0
      %v926 = vadd.f32 %v924, %v925
      %v927 = vsel %vm918, %v862, 0.0
      %v928 = vadd.f32 %v926, %v927
      %v929 = vsel %vm920, %v863, 0.0
      %v930 = vadd.f32 %v928, %v929
      %v931 = vsel %vm918, %v864, 0.0
      %v932 = vadd.f32 %v930, %v931
      %v933 = vsel %vm920, %v865, 0.0
      %v934 = vadd.f32 %v932, %v933
      %v935 = vsel %vm918, %v866, 0.0
      %v936 = vadd.f32 %v934, %v935
      %v937 = vsel %vm920, %v867, 0.0
      %v938 = vadd.f32 %v936, %v937
      %v939 = vsel %vm918, %v868, 0.0
      %v940 = vadd.f32 %v938, %v939
      %v941 = vsel %vm920, %v869, 0.0
      %v942 = vadd.f32 %v940, %v941
      %v943 = vsel %vm918, %v870, 0.0
      %v944 = vadd.f32 %v942, %v943
      %v945 = vsel %vm920, %v871, 0.0
      %v946 = vadd.f32 %v944, %v945
      %v947 = vsel %vm918, %v872, 0.0
      %v948 = vadd.f32 %v946, %v947
      %v949 = vsel %vm920, %v873, 0.0
      %v950 = vadd.f32 %v948, %v949
      %v951 = vsel %vm918, %v874, 0.0
      %v952 = vadd.f32 %v950, %v951
      %v953 = vsel %vm920, %v875, 0.0
      %v954 = vadd.f32 %v952, %v953
      %v955 = vrot.slane %v954, 4
      %v956 = vadd.f32 %v954, %v955
      %v957 = vrot.slane %v956, 2
      %v958 = vadd.f32 %v956, %v957
      %v959 = vrot.slane %v958, 1
      %v960 = vadd.f32 %v958, %v959
      %962 = vrot.lane.b32.xlu0 %v960, 64
      %v963 = vpop.permute.xlu0 %962
      %v965 = vadd.f32 %v917, %v963
      %v966 = vmul.f32 %v532, %v532
      %v967 = vmul.f32 %v533, %v533
      %v968 = vmul.f32 %v534, %v534
      %v969 = vmul.f32 %v535, %v535
      %v970 = vmul.f32 %v536, %v536
      %v971 = vmul.f32 %v537, %v537
      %v972 = vmul.f32 %v538, %v538
      %v973 = vmul.f32 %v539, %v539
      %v974 = vmul.f32 %v540, %v540
      %v975 = vmul.f32 %v541, %v541
      %v976 = vmul.f32 %v542, %v542
      %v977 = vmul.f32 %v543, %v543
      %v978 = vmul.f32 %v544, %v544
      %v979 = vmul.f32 %v545, %v545
      %v980 = vmul.f32 %v546, %v546
      %v981 = vmul.f32 %v547, %v547
      %v982 = vmul.f32 %v548, %v548
      %v983 = vmul.f32 %v549, %v549
      %v984 = vsel %vm221, %v966, 0.0
      %v985 = vsel %vm877, %v967, 0.0
      %v986 = vadd.f32 %v984, %v985
      %v987 = vsel %vm221, %v968, 0.0
      %v988 = vadd.f32 %v986, %v987
      %v989 = vsel %vm877, %v969, 0.0
      %v990 = vadd.f32 %v988, %v989
      %v991 = vsel %vm221, %v970, 0.0
      %v992 = vadd.f32 %v990, %v991
      %v993 = vsel %vm877, %v971, 0.0
      %v994 = vadd.f32 %v992, %v993
      %v995 = vsel %vm221, %v972, 0.0
      %v996 = vadd.f32 %v994, %v995
      %v997 = vsel %vm877, %v973, 0.0
      %v998 = vadd.f32 %v996, %v997
      %v999 = vsel %vm221, %v974, 0.0
      %v1000 = vadd.f32 %v998, %v999
      %v1001 = vsel %vm877, %v975, 0.0
      %v1002 = vadd.f32 %v1000, %v1001
      %v1003 = vsel %vm221, %v976, 0.0
      %v1004 = vadd.f32 %v1002, %v1003
      %v1005 = vsel %vm877, %v977, 0.0
      %v1006 = vadd.f32 %v1004, %v1005
      %v1007 = vsel %vm221, %v978, 0.0
      %v1008 = vadd.f32 %v1006, %v1007
      %v1009 = vsel %vm877, %v979, 0.0
      %v1010 = vadd.f32 %v1008, %v1009
      %v1011 = vsel %vm221, %v980, 0.0
      %v1012 = vadd.f32 %v1010, %v1011
      %v1013 = vsel %vm877, %v981, 0.0
      %v1014 = vadd.f32 %v1012, %v1013
      %v1015 = vsel %vm221, %v982, 0.0
      %v1016 = vadd.f32 %v1014, %v1015
      %v1017 = vsel %vm877, %v983, 0.0
      %v1018 = vadd.f32 %v1016, %v1017
      %v1019 = vrot.slane %v1018, 4
      %v1020 = vadd.f32 %v1018, %v1019
      %v1021 = vrot.slane %v1020, 2
      %v1022 = vadd.f32 %v1020, %v1021
      %v1023 = vrot.slane %v1022, 1
      %v1024 = vadd.f32 %v1022, %v1023
      %v1025 = vmul.f32 %v858, %v858
      %v1026 = vmul.f32 %v859, %v859
      %v1027 = vmul.f32 %v860, %v860
      %v1028 = vmul.f32 %v861, %v861
      %v1029 = vmul.f32 %v862, %v862
      %v1030 = vmul.f32 %v863, %v863
      %v1031 = vmul.f32 %v864, %v864
      %v1032 = vmul.f32 %v865, %v865
      %v1033 = vmul.f32 %v866, %v866
      %v1034 = vmul.f32 %v867, %v867
      %v1035 = vmul.f32 %v868, %v868
      %v1036 = vmul.f32 %v869, %v869
      %v1037 = vmul.f32 %v870, %v870
      %v1038 = vmul.f32 %v871, %v871
      %v1039 = vmul.f32 %v872, %v872
      %v1040 = vmul.f32 %v873, %v873
      %v1041 = vmul.f32 %v874, %v874
      %v1042 = vmul.f32 %v875, %v875
      %v1043 = vsel %vm918, %v1025, 0.0
      %v1044 = vsel %vm920, %v1026, 0.0
      %v1045 = vadd.f32 %v1043, %v1044
      %v1046 = vsel %vm918, %v1027, 0.0
      %v1047 = vadd.f32 %v1045, %v1046
      %v1048 = vsel %vm920, %v1028, 0.0
      %v1049 = vadd.f32 %v1047, %v1048
      %v1050 = vsel %vm918, %v1029, 0.0
      %v1051 = vadd.f32 %v1049, %v1050
      %v1052 = vsel %vm920, %v1030, 0.0
      %v1053 = vadd.f32 %v1051, %v1052
      %v1054 = vsel %vm918, %v1031, 0.0
      %v1055 = vadd.f32 %v1053, %v1054
      %v1056 = vsel %vm920, %v1032, 0.0
      %v1057 = vadd.f32 %v1055, %v1056
      %v1058 = vsel %vm918, %v1033, 0.0
      %v1059 = vadd.f32 %v1057, %v1058
      %v1060 = vsel %vm920, %v1034, 0.0
      %v1061 = vadd.f32 %v1059, %v1060
      %v1062 = vsel %vm918, %v1035, 0.0
      %v1063 = vadd.f32 %v1061, %v1062
      %v1064 = vsel %vm920, %v1036, 0.0
      %v1065 = vadd.f32 %v1063, %v1064
      %v1066 = vsel %vm918, %v1037, 0.0
      %v1067 = vadd.f32 %v1065, %v1066
      %v1068 = vsel %vm920, %v1038, 0.0
      %v1069 = vadd.f32 %v1067, %v1068
      %v1070 = vsel %vm918, %v1039, 0.0
      %v1071 = vadd.f32 %v1069, %v1070
      %v1072 = vsel %vm920, %v1040, 0.0
      %v1073 = vadd.f32 %v1071, %v1072
      %v1074 = vsel %vm918, %v1041, 0.0
      %v1075 = vadd.f32 %v1073, %v1074
      %v1076 = vsel %vm920, %v1042, 0.0
      %v1077 = vadd.f32 %v1075, %v1076
      %v1078 = vrot.slane %v1077, 4
      %v1079 = vadd.f32 %v1077, %v1078
      %v1080 = vrot.slane %v1079, 2
      %v1081 = vadd.f32 %v1079, %v1080
      %v1082 = vrot.slane %v1081, 1
      %v1083 = vadd.f32 %v1081, %v1082
      %1085 = vrot.lane.b32.xlu0 %v1083, 64
      %v1086 = vpop.permute.xlu0 %1085
      %v1088 = vadd.f32 %v1024, %v1086
      %1089 = vst.msk [vmem:[%s183] sm:$0x1] %vm877, %v965
      %1090 = vst.msk [vmem:[%s183 + $0x1] sm:$0x1] %vm877, %v1088
      %1109 = vrot.lane.b32.xlu0 %v858, 64
      %v1110 = vpop.permute.xlu0 %1109
      %1111 = vrot.lane.b32.xlu0 %v859, 64
      %v1112 = vpop.permute.xlu0 %1111
      %1113 = vrot.lane.b32.xlu0 %v860, 64
      %v1114 = vpop.permute.xlu0 %1113
      %1115 = vrot.lane.b32.xlu0 %v861, 64
      %v1116 = vpop.permute.xlu0 %1115
      %1117 = vrot.lane.b32.xlu0 %v862, 64
      %v1118 = vpop.permute.xlu0 %1117
      %1119 = vrot.lane.b32.xlu0 %v863, 64
      %v1120 = vpop.permute.xlu0 %1119
      %1121 = vrot.lane.b32.xlu0 %v864, 64
      %v1122 = vpop.permute.xlu0 %1121
      %1123 = vrot.lane.b32.xlu0 %v865, 64
      %v1124 = vpop.permute.xlu0 %1123
      %1125 = vrot.lane.b32.xlu0 %v866, 64
      %v1126 = vpop.permute.xlu0 %1125
      %1127 = vrot.lane.b32.xlu0 %v867, 64
      %v1128 = vpop.permute.xlu0 %1127
      %1129 = vrot.lane.b32.xlu0 %v868, 64
      %v1130 = vpop.permute.xlu0 %1129
      %1131 = vrot.lane.b32.xlu0 %v869, 64
      %v1132 = vpop.permute.xlu0 %1131
      %1133 = vrot.lane.b32.xlu0 %v870, 64
      %v1134 = vpop.permute.xlu0 %1133
      %1135 = vrot.lane.b32.xlu0 %v871, 64
      %v1136 = vpop.permute.xlu0 %1135
      %1137 = vrot.lane.b32.xlu0 %v872, 64
      %v1138 = vpop.permute.xlu0 %1137
      %1139 = vrot.lane.b32.xlu0 %v873, 64
      %v1140 = vpop.permute.xlu0 %1139
      %1141 = vrot.lane.b32.xlu0 %v874, 64
      %v1142 = vpop.permute.xlu0 %1141
      %1143 = vrot.lane.b32.xlu0 %v875, 64
      %v1144 = vpop.permute.xlu0 %1143
      %1163 = vst.msk [vmem:[%s179] sm:$0xff] %vm221, %v532
      %1164 = vst.msk [vmem:[%s179 + $0x8] sm:$0x1] %vm877, %v533
      %1165 = vst.msk [vmem:[%s179 + $0x10] sm:$0xff] %vm221, %v1110
      %1166 = vst.msk [vmem:[%s179 + $0x18] sm:$0x1] %vm877, %v1112
      %1167 = vst.msk [vmem:[%s179 + $0x20] sm:$0xff] %vm221, %v534
      %1168 = vst.msk [vmem:[%s179 + $0x28] sm:$0x1] %vm877, %v535
      %1169 = vst.msk [vmem:[%s179 + $0x30] sm:$0xff] %vm221, %v1114
      %1170 = vst.msk [vmem:[%s179 + $0x38] sm:$0x1] %vm877, %v1116
      %1171 = vst.msk [vmem:[%s179 + $0x40] sm:$0xff] %vm221, %v536
      %1172 = vst.msk [vmem:[%s179 + $0x48] sm:$0x1] %vm877, %v537
      %1173 = vst.msk [vmem:[%s179 + $0x50] sm:$0xff] %vm221, %v1118
      %1174 = vst.msk [vmem:[%s179 + $0x58] sm:$0x1] %vm877, %v1120
      %1175 = vst.msk [vmem:[%s179 + $0x60] sm:$0xff] %vm221, %v538
      %1176 = vst.msk [vmem:[%s179 + $0x68] sm:$0x1] %vm877, %v539
      %1177 = vst.msk [vmem:[%s179 + $0x70] sm:$0xff] %vm221, %v1122
      %1178 = vst.msk [vmem:[%s179 + $0x78] sm:$0x1] %vm877, %v1124
      %1179 = vst.msk [vmem:[%s179 + $0x80] sm:$0xff] %vm221, %v540
      %1180 = vst.msk [vmem:[%s179 + $0x88] sm:$0x1] %vm877, %v541
      %1181 = vst.msk [vmem:[%s179 + $0x90] sm:$0xff] %vm221, %v1126
      %1182 = vst.msk [vmem:[%s179 + $0x98] sm:$0x1] %vm877, %v1128
      %1183 = vst.msk [vmem:[%s179 + $0xa0] sm:$0xff] %vm221, %v542
      %1184 = vst.msk [vmem:[%s179 + $0xa8] sm:$0x1] %vm877, %v543
      %1185 = vst.msk [vmem:[%s179 + $0xb0] sm:$0xff] %vm221, %v1130
      %1186 = vst.msk [vmem:[%s179 + $0xb8] sm:$0x1] %vm877, %v1132
      %1187 = vst.msk [vmem:[%s179 + $0xc0] sm:$0xff] %vm221, %v544
      %1188 = vst.msk [vmem:[%s179 + $0xc8] sm:$0x1] %vm877, %v545
      %1189 = vst.msk [vmem:[%s179 + $0xd0] sm:$0xff] %vm221, %v1134
      %1190 = vst.msk [vmem:[%s179 + $0xd8] sm:$0x1] %vm877, %v1136
      %1191 = vst.msk [vmem:[%s179 + $0xe0] sm:$0xff] %vm221, %v546
      %1192 = vst.msk [vmem:[%s179 + $0xe8] sm:$0x1] %vm877, %v547
      %1193 = vst.msk [vmem:[%s179 + $0xf0] sm:$0xff] %vm221, %v1138
      %1194 = vst.msk [vmem:[%s179 + $0xf8] sm:$0x1] %vm877, %v1140
      %1195 = vst.msk [vmem:[%s179 + $0x100] sm:$0xff] %vm221, %v548
      %1196 = vst.msk [vmem:[%s179 + $0x108] sm:$0x1] %vm877, %v549
      %1197 = vst.msk [vmem:[%s179 + $0x110] sm:$0xff] %vm221, %v1142
      %1198 = vst.msk [vmem:[%s179 + $0x118] sm:$0x1] %vm877, %v1144
      %p1199 = scmp.lt.s32.totalorder %s15, 1
      %s1200 = scalar_select %p1199, %s15, 1
      %s1201 = smul.addr %s1200, 36
      %s1202 = smul.addr %s1201, 8
      %s1203 = scalar_lea.vmem %s2, %s1202
      %p1204 = scmp.lt.s32.totalorder %s15, 1
      %s1205 = scalar_select %p1204, %s15, 1
      %s1206 = smul.addr %s1205, 2
      %s1207 = scalar_lea.vmem %s3, %s1206
      // Predicated region
      $region29: #{gen_block.2} parent=27 // pred_check
        %p1208 = pneg %p80
      $region30: #{gen_block.2} parent=27 // pred_check_branch
        %1210 = sbr.rel (%p1208) target = $region32
      $region31: #{gen_block.2} parent=27 // pred_region
        _
      $region32: #{gen_block.2} parent=27 // pred_fallthru
        _
      // Predicated region
      $region33: #{gen_block.2} parent=27 // pred_check
        %p1211 = pneg %p106
      $region34: #{gen_block.2} parent=27 // pred_check_branch
        %1213 = sbr.rel (%p1211) target = $region36
      $region35: #{gen_block.2} parent=27 // pred_region
        _
      $region36: #{gen_block.2} parent=27 // pred_fallthru
        _
    $region28: #{gen_block.2} parent=5 // pred_fallthru
      _
    %p1214 = scmp.le.s32.totalorder 2, %s10
    // Predicated region
    $region37: #{gen_block.2} parent=5 // pred_check
      %p1215 = pneg %p1214
    $region38: #{gen_block.2} parent=5 // pred_check_branch
      %1217 = sbr.rel (%p1215) target = $region40
    $region39: #{gen_block.2} parent=5 // pred_region
      %s1218 = ssub.s32 %s10, 2
      // Predicated region
      $region41: #{gen_block.2} parent=39 // pred_check
        %p1219 = pneg %p86
      $region42: #{gen_block.2} parent=39 // pred_check_branch
        %1221 = sbr.rel (%p1219) target = $region44
      $region43: #{gen_block.2} parent=39 // pred_region
        %p1222 = scmp.lt.s32.totalorder %s16, 1
        %s1223 = scalar_select %p1222, %s16, 1
        %s1224 = smul.addr %s1223, 36
        %s1225 = smul.addr %s1224, 8
        %s1226 = scalar_lea.vmem %s2, %s1225
      $region44: #{gen_block.2} parent=39 // pred_fallthru
        _
      // Predicated region
      $region45: #{gen_block.2} parent=39 // pred_check
        %p1227 = pneg %p112
      $region46: #{gen_block.2} parent=39 // pred_check_branch
        %1229 = sbr.rel (%p1227) target = $region48
      $region47: #{gen_block.2} parent=39 // pred_region
        %p1230 = scmp.lt.s32.totalorder %s16, 1
        %s1231 = scalar_select %p1230, %s16, 1
        %s1232 = smul.addr %s1231, 2
        %s1233 = scalar_lea.vmem %s3, %s1232
      $region48: #{gen_block.2} parent=39 // pred_fallthru
        _
    $region40: #{gen_block.2} parent=5 // pred_fallthru
      _
  $region6: #{gen_block.2} parent=0 // loop_footer
    %s14 = sadd.s32 1, %s10
  $region7: #{gen_block.2} parent=0 // loop_footer_branch
    %9 = sbr.rel target = $region3
  $region8: #{gen_block.2} parent=0 // loop_exit
    _

</llo_original>
